<compile_context>
chip_gen: v7x
topology: tpu7x:2x2x1
jax: 0.10.0
libtpu: 0.0.40
codegen_flags: <defaults>
</compile_context>

<pallas_src>
import numpy as np
import jax
import jax.numpy as jnp
from jax import lax
from jax.experimental import pallas as pl
from jax.experimental.pallas import tpu as pltpu

START_TAG = "<START>"
STOP_TAG = "<STOP>"
TAG_TO_INDEX = {"O": 0, "B-PER": 1, "I-PER": 2, "B-ORG": 3, "I-ORG": 4,
                "B-LOC": 5, "I-LOC": 6, START_TAG: 7, STOP_TAG: 8}
NUM_TAGS = len(TAG_TO_INDEX)          # 9
START_IDX = TAG_TO_INDEX[START_TAG]   # 7
STOP_IDX = TAG_TO_INDEX[STOP_TAG]     # 8
NEG_INF = -10000.0
T_PAD = 128                           # lane-dense padded tag dimension


# ---------------------------------------------------------------------------
# Fused kernel: encoder layer + fc projection + batched Viterbi DP
# ---------------------------------------------------------------------------
def _layer_norm(x, g, b, eps=1e-12):
    mu = jnp.mean(x, axis=-1, keepdims=True)
    var = jnp.mean((x - mu) ** 2, axis=-1, keepdims=True)
    return (x - mu) * lax.rsqrt(var + eps) * g + b


def bert_crf_kernel(max_len_ref, lens_ref, x_ref,
                    wqkvo_ref, vecs_h_ref, w1_ref, b1_ref, w2_ref,
                    wfc_ref, bfc_ref, trans_ref,
                    bptr_ref, term_ref,
                    feats_sc, fv_sc):
    # ----------------- encoder + fc (whole batch in one shot) -----------------
    x = x_ref[...]                                   # (B, S, H)
    B, S, H = x.shape
    x2 = x.reshape(B * S, H)

    vh = vecs_h_ref[...]                             # packed (9, H) vectors
    bq, bk, bv, bo = vh[0:1], vh[1:2], vh[2:3], vh[3:4]
    g1, be1 = vh[4:5], vh[5:6]
    b2, g2, be2 = vh[6:7], vh[7:8], vh[8:9]

    # 1/sqrt(H) attention scale is already folded into wq / bq (wrapper).
    q = jnp.dot(x2, wqkvo_ref[0], preferred_element_type=jnp.float32) + bq
    k = jnp.dot(x2, wqkvo_ref[1], preferred_element_type=jnp.float32) + bk
    v = jnp.dot(x2, wqkvo_ref[2], preferred_element_type=jnp.float32) + bv

    q3 = q.reshape(B, S, H)
    k3 = k.reshape(B, S, H)
    v3 = v.reshape(B, S, H)

    scores = jnp.einsum("bqd,bkd->bqk", q3, k3,
                        preferred_element_type=jnp.float32)          # (B,S,S)
    scores = scores - jnp.max(scores, axis=-1, keepdims=True)
    probs = jnp.exp(scores)
    probs = probs * pl.reciprocal(jnp.sum(probs, axis=-1, keepdims=True),
                                  approx=True)
    attn = jnp.einsum("bqk,bkd->bqd", probs, v3,
                      preferred_element_type=jnp.float32)            # (B,S,H)

    attn2 = jnp.dot(attn.reshape(B * S, H), wqkvo_ref[3],
                    preferred_element_type=jnp.float32) + bo
    h = _layer_norm(x2 + attn2, g1, be1)

    ff = jnp.dot(h, w1_ref[...], preferred_element_type=jnp.float32) + b1_ref[...]
    ff = jax.nn.gelu(ff)
    ff = jnp.dot(ff, w2_ref[...], preferred_element_type=jnp.float32) + b2
    h2 = _layer_norm(h + ff, g2, be2)

    # fc: hidden -> padded tag lanes.  Padded lanes get bfc = NEG_INF.
    feats = (jnp.dot(h2, wfc_ref[...], preferred_element_type=jnp.float32)
             + bfc_ref[...])                                         # (B*S, T_PAD)
    feats_sc[...] = feats.reshape(B, S, T_PAD)

    # ----------------- batched Viterbi dynamic program ------------------------
    max_len = max_len_ref[0]                         # dynamic trip count (SMEM)
    lens = lens_ref[...]                             # (B, 1) int32, for masking

    lane = lax.broadcasted_iota(jnp.int32, (B, T_PAD), 1)
    # init_vvars: -10000 everywhere, 0 at START (padded lanes also -10000)
    fv_sc[...] = jnp.where(lane == START_IDX, 0.0, NEG_INF).astype(jnp.float32)

    trans = trans_ref[...]                           # (T_PAD, T_PAD)
    col = lax.broadcasted_iota(jnp.int32, (1, T_PAD, T_PAD), 2)   # hoisted

    # NOTE: bptr rows >= max_len are never written (and never read on the host).
    @pl.loop(0, max_len)
    def _(step):
        fv = fv_sc[...]                                              # (B, T_PAD)
        # ntv[b, next, prev] = forward_var[b, prev] + transitions[next, prev]
        ntv = fv[:, None, :] + trans[None, :, :]                     # (B,T,T)
        best_val = jnp.max(ntv, axis=2)                              # (B, T_PAD)
        is_best = ntv == best_val[:, :, None]
        # first-max index (matches torch.max tie-breaking)
        best_id = jnp.min(jnp.where(is_best, col, T_PAD), axis=2)    # (B, T_PAD)

        feat = feats_sc[:, pl.ds(step + 1, 1), :][:, 0, :]           # feats[1+step]
        live = step < lens                                           # (B, 1)
        fv_sc[...] = jnp.where(live, best_val + feat, fv)
        bptr_ref[:, pl.ds(step, 1), :] = best_id[:, None, :].astype(jnp.int32)

    # terminal_var = forward_var + transitions[STOP]
    term_ref[...] = fv_sc[...] + trans_ref[pl.ds(STOP_IDX, 1), :]


def bert_crf_decode(x, lengths, weights):
    """x: [B, S, H]; lengths: [B] int32 -> (backpointers [B,S-1,T_PAD] int32,
    terminal scores [B, T_PAD] float32)."""
    B, S, H = x.shape
    max_len = jnp.max(lengths).astype(jnp.int32).reshape(1)
    lens_col = lengths.astype(jnp.int32).reshape(B, 1)

    vmem = pl.BlockSpec(memory_space=pltpu.MemorySpace.VMEM)
    smem = pl.BlockSpec(memory_space=pltpu.MemorySpace.SMEM)

    return pl.pallas_call(
        bert_crf_kernel,
        out_shape=(jax.ShapeDtypeStruct((B, S - 1, T_PAD), jnp.int32),
                   jax.ShapeDtypeStruct((B, T_PAD), jnp.float32)),
        in_specs=[smem, vmem, vmem] + [vmem] * len(weights),
        out_specs=(vmem, vmem),
        scratch_shapes=[pltpu.VMEM((B, S, T_PAD), jnp.float32),   # emissions
                        pltpu.VMEM((B, T_PAD), jnp.float32)],     # forward vars
    )(max_len, lens_col, x, *weights)


# ---------------------------------------------------------------------------
# Parameter init (deterministic, synthetic -- stands in for the checkpoint)
# ---------------------------------------------------------------------------
def init_params(key, vocab, seq, hidden, ffn, num_tags):
    ks = jax.random.split(key, 12)

    def w(k, shape, scale=0.02):
        return (scale * jax.random.normal(k, shape)).astype(jnp.float32)

    trans = jax.random.normal(ks[11], (num_tags, num_tags)).astype(jnp.float32)
    trans = trans.at[START_IDX, :].set(NEG_INF)   # never transition TO START
    trans = trans.at[:, STOP_IDX].set(NEG_INF)    # never transition FROM STOP

    return dict(
        word_emb=w(ks[0], (vocab, hidden)),
        pos_emb=w(ks[1], (seq, hidden)),
        wq=w(ks[2], (hidden, hidden)), bq=jnp.zeros((1, hidden), jnp.float32),
        wk=w(ks[3], (hidden, hidden)), bk=jnp.zeros((1, hidden), jnp.float32),
        wv=w(ks[4], (hidden, hidden)), bv=jnp.zeros((1, hidden), jnp.float32),
        wo=w(ks[5], (hidden, hidden)), bo=jnp.zeros((1, hidden), jnp.float32),
        ln1_g=jnp.ones((1, hidden), jnp.float32),
        ln1_b=jnp.zeros((1, hidden), jnp.float32),
        w1=w(ks[6], (hidden, ffn)), b1=jnp.zeros((1, ffn), jnp.float32),
        w2=w(ks[7], (ffn, hidden)), b2=jnp.zeros((1, hidden), jnp.float32),
        ln2_g=jnp.ones((1, hidden), jnp.float32),
        ln2_b=jnp.zeros((1, hidden), jnp.float32),
        wfc=w(ks[8], (hidden, num_tags)),
        bfc=jnp.zeros((1, num_tags), jnp.float32),
        transitions=trans,
    )


def build_kernel_inputs(params):
    """Pack / pad parameters into the lane-dense kernel layout."""
    hidden = params["wq"].shape[0]
    scale = jnp.float32(1.0 / np.sqrt(hidden))     # fold 1/sqrt(H) into q path
    wqkvo = jnp.stack([params["wq"] * scale, params["wk"],
                       params["wv"], params["wo"]])                      # (4,H,H)
    vecs_h = jnp.concatenate(
        [params["bq"] * scale, params["bk"], params["bv"], params["bo"],
         params["ln1_g"], params["ln1_b"], params["b2"],
         params["ln2_g"], params["ln2_b"]], axis=0)                      # (9,H)
    wfc_pad = jnp.zeros((hidden, T_PAD), jnp.float32)
    wfc_pad = wfc_pad.at[:, :NUM_TAGS].set(params["wfc"])
    bfc_pad = jnp.full((1, T_PAD), NEG_INF, jnp.float32)
    bfc_pad = bfc_pad.at[:, :NUM_TAGS].set(params["bfc"])
    trans_pad = jnp.full((T_PAD, T_PAD), NEG_INF, jnp.float32)
    trans_pad = trans_pad.at[:NUM_TAGS, :NUM_TAGS].set(params["transitions"])
    return (wqkvo, vecs_h, params["w1"], params["b1"], params["w2"],
            wfc_pad, bfc_pad, trans_pad)


# ---------------------------------------------------------------------------
# Forward pass: features -> per-example Viterbi decode -> flat tag list
# ---------------------------------------------------------------------------
def bert_crf_forward(sentences, targets_length, params):
    # TODO(synk): pretrained 12-layer bert-base-chinese is replaced by a single
    # deterministic synthetic encoder layer (no checkpoint loading allowed).
    x = params["word_emb"][sentences] + params["pos_emb"][None, :, :]   # [B,S,H]
    weights = build_kernel_inputs(params)
    lengths = jnp.asarray(targets_length, jnp.int32)

    bptrs, terminal = bert_crf_decode(x, lengths, weights)
    bptrs, terminal = jax.block_until_ready((bptrs, terminal))

    bptrs_np = np.asarray(bptrs)
    term_np = np.asarray(terminal)[:, :NUM_TAGS]    # drop padded tag lanes
    targets_sequences = []
    for idx in range(sentences.shape[0]):
        L = int(targets_length[idx])
        best = int(np.argmax(term_np[idx]))
        path = [best]
        for t in range(L - 1, -1, -1):              # reversed(backpointers)
            best = int(bptrs_np[idx, t, best])
            path.append(best)
        start = path.pop()
        assert start == START_IDX
        path.reverse()
        targets_sequences.extend(path)
    return targets_sequences


if __name__ == "__main__":
    B, S, H, FFN, VOCAB = 2, 8, 32, 64, 100
    key = jax.random.PRNGKey(0)
    pkey, skey = jax.random.split(key)

    params = init_params(pkey, VOCAB, S, H, FFN, NUM_TAGS)
    sentences = jax.random.randint(skey, (B, S), 0, VOCAB, dtype=jnp.int32)
    # decode over feats[1 : length + 1] (skip the [CLS] position), so length <= S-1
    targets_length = np.array([7, 5], dtype=np.int32)

    tags = bert_crf_forward(sentences, targets_length, params)
    assert len(tags) == int(targets_length.sum())
    assert all(0 <= t < NUM_TAGS for t in tags)
    print("KERNEL_OK")
</pallas_src>

<mosaic_0001>
module attributes {stable_mosaic.version = 11 : i64} {
  func.func @bert_crf_kernel(%arg0: memref<1xi32, #tpu.memory_space<smem>>, %arg1: memref<2x1xi32, #tpu.memory_space<vmem>>, %arg2: memref<2x8x32xf32, #tpu.memory_space<vmem>>, %arg3: memref<4x32x32xf32, #tpu.memory_space<vmem>>, %arg4: memref<9x32xf32, #tpu.memory_space<vmem>>, %arg5: memref<32x64xf32, #tpu.memory_space<vmem>>, %arg6: memref<1x64xf32, #tpu.memory_space<vmem>>, %arg7: memref<64x32xf32, #tpu.memory_space<vmem>>, %arg8: memref<32x128xf32, #tpu.memory_space<vmem>>, %arg9: memref<1x128xf32, #tpu.memory_space<vmem>>, %arg10: memref<128x128xf32, #tpu.memory_space<vmem>>, %arg11: memref<2x7x128xi32, #tpu.memory_space<vmem>>, %arg12: memref<2x128xf32, #tpu.memory_space<vmem>>, %arg13: memref<2x8x128xf32, #tpu.memory_space<vmem>>, %arg14: memref<2x128xf32, #tpu.memory_space<vmem>>) attributes {dimension_semantics = [], scalar_prefetch = 0 : i64, scratch_operands = 2 : i64, tpu.core_type = #tpu.core_type<tc>} {
    %c0 = arith.constant 0 : index
    %c0_0 = arith.constant 0 : index
    %c0_1 = arith.constant 0 : index
    %0 = vector.load %arg2[%c0, %c0_0, %c0_1] : memref<2x8x32xf32, #tpu.memory_space<vmem>>, vector<2x8x32xf32>
    %1 = vector.shape_cast %0 : vector<2x8x32xf32> to vector<16x32xf32>
    %c0_2 = arith.constant 0 : index
    %c0_3 = arith.constant 0 : index
    %2 = vector.load %arg4[%c0_2, %c0_3] : memref<9x32xf32, #tpu.memory_space<vmem>>, vector<9x32xf32>
    %3 = vector.extract_strided_slice %2 {offsets = [0, 0], sizes = [1, 32], strides = [1, 1]} : vector<9x32xf32> to vector<1x32xf32>
    %4 = vector.extract_strided_slice %2 {offsets = [1, 0], sizes = [1, 32], strides = [1, 1]} : vector<9x32xf32> to vector<1x32xf32>
    %5 = vector.extract_strided_slice %2 {offsets = [2, 0], sizes = [1, 32], strides = [1, 1]} : vector<9x32xf32> to vector<1x32xf32>
    %6 = vector.extract_strided_slice %2 {offsets = [3, 0], sizes = [1, 32], strides = [1, 1]} : vector<9x32xf32> to vector<1x32xf32>
    %7 = vector.extract_strided_slice %2 {offsets = [4, 0], sizes = [1, 32], strides = [1, 1]} : vector<9x32xf32> to vector<1x32xf32>
    %8 = vector.extract_strided_slice %2 {offsets = [5, 0], sizes = [1, 32], strides = [1, 1]} : vector<9x32xf32> to vector<1x32xf32>
    %9 = vector.extract_strided_slice %2 {offsets = [6, 0], sizes = [1, 32], strides = [1, 1]} : vector<9x32xf32> to vector<1x32xf32>
    %10 = vector.extract_strided_slice %2 {offsets = [7, 0], sizes = [1, 32], strides = [1, 1]} : vector<9x32xf32> to vector<1x32xf32>
    %11 = vector.extract_strided_slice %2 {offsets = [8, 0], sizes = [1, 32], strides = [1, 1]} : vector<9x32xf32> to vector<1x32xf32>
    %c0_4 = arith.constant 0 : index
    %c0_5 = arith.constant 0 : index
    %c0_6 = arith.constant 0 : index
    %12 = vector.load %arg3[%c0_4, %c0_5, %c0_6] : memref<4x32x32xf32, #tpu.memory_space<vmem>>, vector<1x32x32xf32>
    %13 = vector.shape_cast %12 : vector<1x32x32xf32> to vector<32x32xf32>
    %cst = arith.constant dense<0.000000e+00> : vector<16x32xf32>
    %14 = tpu.matmul %1, %13, %cst {dimension_numbers = #tpu.dot_dimension_numbers<[1], [0], [0], [1], [0, 0, 1, 1], [], []>} : vector<16x32xf32>, vector<32x32xf32>, vector<16x32xf32> -> vector<16x32xf32>
    %15 = vector.broadcast %3 : vector<1x32xf32> to vector<16x32xf32>
    %16 = arith.addf %14, %15 : vector<16x32xf32>
    %c1 = arith.constant 1 : index
    %c0_7 = arith.constant 0 : index
    %c0_8 = arith.constant 0 : index
    %17 = vector.load %arg3[%c1, %c0_7, %c0_8] : memref<4x32x32xf32, #tpu.memory_space<vmem>>, vector<1x32x32xf32>
    %18 = vector.shape_cast %17 : vector<1x32x32xf32> to vector<32x32xf32>
    %cst_9 = arith.constant dense<0.000000e+00> : vector<16x32xf32>
    %19 = tpu.matmul %1, %18, %cst_9 {dimension_numbers = #tpu.dot_dimension_numbers<[1], [0], [0], [1], [0, 0, 1, 1], [], []>} : vector<16x32xf32>, vector<32x32xf32>, vector<16x32xf32> -> vector<16x32xf32>
    %20 = vector.broadcast %4 : vector<1x32xf32> to vector<16x32xf32>
    %21 = arith.addf %19, %20 : vector<16x32xf32>
    %c2 = arith.constant 2 : index
    %c0_10 = arith.constant 0 : index
    %c0_11 = arith.constant 0 : index
    %22 = vector.load %arg3[%c2, %c0_10, %c0_11] : memref<4x32x32xf32, #tpu.memory_space<vmem>>, vector<1x32x32xf32>
    %23 = vector.shape_cast %22 : vector<1x32x32xf32> to vector<32x32xf32>
    %cst_12 = arith.constant dense<0.000000e+00> : vector<16x32xf32>
    %24 = tpu.matmul %1, %23, %cst_12 {dimension_numbers = #tpu.dot_dimension_numbers<[1], [0], [0], [1], [0, 0, 1, 1], [], []>} : vector<16x32xf32>, vector<32x32xf32>, vector<16x32xf32> -> vector<16x32xf32>
    %25 = vector.broadcast %5 : vector<1x32xf32> to vector<16x32xf32>
    %26 = arith.addf %24, %25 : vector<16x32xf32>
    %27 = vector.shape_cast %16 : vector<16x32xf32> to vector<2x8x32xf32>
    %28 = vector.shape_cast %21 : vector<16x32xf32> to vector<2x8x32xf32>
    %29 = vector.shape_cast %26 : vector<16x32xf32> to vector<2x8x32xf32>
    "tpu.trace_start"() <{level = 10 : i32, message = "bqd,bkd->bqk"}> : () -> ()
    %cst_13 = arith.constant dense<0.000000e+00> : vector<2x8x8xf32>
    %30 = tpu.matmul %27, %28, %cst_13 {dimension_numbers = #tpu.dot_dimension_numbers<[2], [2], [1], [1], [0, 0, 0, 1, 1, 1], [0], [0]>} : vector<2x8x32xf32>, vector<2x8x32xf32>, vector<2x8x8xf32> -> vector<2x8x8xf32>
    "tpu.trace_stop"() : () -> ()
    %cst_14 = arith.constant dense<0xFF800000> : vector<2x8xf32>
    %31 = vector.multi_reduction <maximumf>, %30, %cst_14 [2] : vector<2x8x8xf32> to vector<2x8xf32>
    %32 = vector.shape_cast %31 : vector<2x8xf32> to vector<2x8x1xf32>
    %33 = vector.broadcast %32 : vector<2x8x1xf32> to vector<2x8x8xf32>
    %34 = arith.subf %30, %33 : vector<2x8x8xf32>
    %35 = math.exp %34 : vector<2x8x8xf32>
    %cst_15 = arith.constant dense<0.000000e+00> : vector<2x8xf32>
    %36 = vector.multi_reduction <add>, %35, %cst_15 [2] : vector<2x8x8xf32> to vector<2x8xf32>
    %37 = vector.shape_cast %36 : vector<2x8xf32> to vector<2x8x1xf32>
    %38 = tpu.reciprocal %37 {approx = true} : vector<2x8x1xf32> -> vector<2x8x1xf32>
    %39 = vector.broadcast %38 : vector<2x8x1xf32> to vector<2x8x8xf32>
    %40 = arith.mulf %35, %39 : vector<2x8x8xf32>
    "tpu.trace_start"() <{level = 10 : i32, message = "bqk,bkd->bqd"}> : () -> ()
    %cst_16 = arith.constant dense<0.000000e+00> : vector<2x8x32xf32>
    %41 = tpu.matmul %40, %29, %cst_16 {dimension_numbers = #tpu.dot_dimension_numbers<[2], [1], [1], [2], [0, 0, 0, 1, 1, 2], [0], [0]>} : vector<2x8x8xf32>, vector<2x8x32xf32>, vector<2x8x32xf32> -> vector<2x8x32xf32>
    "tpu.trace_stop"() : () -> ()
    %42 = vector.shape_cast %41 : vector<2x8x32xf32> to vector<16x32xf32>
    %c3 = arith.constant 3 : index
    %c0_17 = arith.constant 0 : index
    %c0_18 = arith.constant 0 : index
    %43 = vector.load %arg3[%c3, %c0_17, %c0_18] : memref<4x32x32xf32, #tpu.memory_space<vmem>>, vector<1x32x32xf32>
    %44 = vector.shape_cast %43 : vector<1x32x32xf32> to vector<32x32xf32>
    %cst_19 = arith.constant dense<0.000000e+00> : vector<16x32xf32>
    %45 = tpu.matmul %42, %44, %cst_19 {dimension_numbers = #tpu.dot_dimension_numbers<[1], [0], [0], [1], [0, 0, 1, 1], [], []>} : vector<16x32xf32>, vector<32x32xf32>, vector<16x32xf32> -> vector<16x32xf32>
    %46 = vector.broadcast %6 : vector<1x32xf32> to vector<16x32xf32>
    %47 = arith.addf %45, %46 : vector<16x32xf32>
    %48 = arith.addf %1, %47 : vector<16x32xf32>
    %cst_20 = arith.constant dense<0.000000e+00> : vector<16xf32>
    %49 = vector.multi_reduction <add>, %48, %cst_20 [1] : vector<16x32xf32> to vector<16xf32>
    %50 = vector.shape_cast %49 : vector<16xf32> to vector<16x1xf32>
    %cst_21 = arith.constant 3.200000e+01 : f32
    %51 = vector.broadcast %cst_21 : f32 to vector<16x1xf32>
    %52 = arith.divf %50, %51 : vector<16x1xf32>
    %53 = vector.broadcast %52 : vector<16x1xf32> to vector<16x32xf32>
    %54 = arith.subf %48, %53 : vector<16x32xf32>
    %55 = arith.mulf %54, %54 : vector<16x32xf32>
    %cst_22 = arith.constant dense<0.000000e+00> : vector<16xf32>
    %56 = vector.multi_reduction <add>, %55, %cst_22 [1] : vector<16x32xf32> to vector<16xf32>
    %57 = vector.shape_cast %56 : vector<16xf32> to vector<16x1xf32>
    %cst_23 = arith.constant 3.200000e+01 : f32
    %58 = vector.broadcast %cst_23 : f32 to vector<16x1xf32>
    %59 = arith.divf %57, %58 : vector<16x1xf32>
    %60 = vector.broadcast %52 : vector<16x1xf32> to vector<16x32xf32>
    %61 = arith.subf %48, %60 : vector<16x32xf32>
    %cst_24 = arith.constant 9.99999996E-13 : f32
    %62 = vector.broadcast %cst_24 : f32 to vector<16x1xf32>
    %63 = arith.addf %59, %62 : vector<16x1xf32>
    %64 = math.rsqrt %63 : vector<16x1xf32>
    %65 = vector.broadcast %64 : vector<16x1xf32> to vector<16x32xf32>
    %66 = arith.mulf %61, %65 : vector<16x32xf32>
    %67 = vector.broadcast %7 : vector<1x32xf32> to vector<16x32xf32>
    %68 = arith.mulf %66, %67 : vector<16x32xf32>
    %69 = vector.broadcast %8 : vector<1x32xf32> to vector<16x32xf32>
    %70 = arith.addf %68, %69 : vector<16x32xf32>
    %c0_25 = arith.constant 0 : index
    %c0_26 = arith.constant 0 : index
    %71 = vector.load %arg5[%c0_25, %c0_26] : memref<32x64xf32, #tpu.memory_space<vmem>>, vector<32x64xf32>
    %cst_27 = arith.constant dense<0.000000e+00> : vector<16x64xf32>
    %72 = tpu.matmul %70, %71, %cst_27 {dimension_numbers = #tpu.dot_dimension_numbers<[1], [0], [0], [1], [0, 0, 1, 1], [], []>} : vector<16x32xf32>, vector<32x64xf32>, vector<16x64xf32> -> vector<16x64xf32>
    %c0_28 = arith.constant 0 : index
    %c0_29 = arith.constant 0 : index
    %73 = vector.load %arg6[%c0_28, %c0_29] : memref<1x64xf32, #tpu.memory_space<vmem>>, vector<1x64xf32>
    %74 = vector.broadcast %73 : vector<1x64xf32> to vector<16x64xf32>
    %75 = arith.addf %72, %74 : vector<16x64xf32>
    %76 = arith.mulf %75, %75 : vector<16x64xf32>
    %77 = arith.mulf %75, %76 : vector<16x64xf32>
    %cst_30 = arith.constant 4.471500e-02 : f32
    %78 = vector.broadcast %cst_30 : f32 to vector<16x64xf32>
    %79 = arith.mulf %78, %77 : vector<16x64xf32>
    %80 = arith.addf %75, %79 : vector<16x64xf32>
    %cst_31 = arith.constant 0.797884583 : f32
    %81 = vector.broadcast %cst_31 : f32 to vector<16x64xf32>
    %82 = arith.mulf %81, %80 : vector<16x64xf32>
    %83 = math.tanh %82 : vector<16x64xf32>
    %cst_32 = arith.constant 1.000000e+00 : f32
    %84 = vector.broadcast %cst_32 : f32 to vector<16x64xf32>
    %85 = arith.addf %84, %83 : vector<16x64xf32>
    %cst_33 = arith.constant 5.000000e-01 : f32
    %86 = vector.broadcast %cst_33 : f32 to vector<16x64xf32>
    %87 = arith.mulf %86, %85 : vector<16x64xf32>
    %88 = arith.mulf %75, %87 : vector<16x64xf32>
    %c0_34 = arith.constant 0 : index
    %c0_35 = arith.constant 0 : index
    %89 = vector.load %arg7[%c0_34, %c0_35] : memref<64x32xf32, #tpu.memory_space<vmem>>, vector<64x32xf32>
    %cst_36 = arith.constant dense<0.000000e+00> : vector<16x32xf32>
    %90 = tpu.matmul %88, %89, %cst_36 {dimension_numbers = #tpu.dot_dimension_numbers<[1], [0], [0], [1], [0, 0, 1, 1], [], []>} : vector<16x64xf32>, vector<64x32xf32>, vector<16x32xf32> -> vector<16x32xf32>
    %91 = vector.broadcast %9 : vector<1x32xf32> to vector<16x32xf32>
    %92 = arith.addf %90, %91 : vector<16x32xf32>
    %93 = arith.addf %70, %92 : vector<16x32xf32>
    %cst_37 = arith.constant dense<0.000000e+00> : vector<16xf32>
    %94 = vector.multi_reduction <add>, %93, %cst_37 [1] : vector<16x32xf32> to vector<16xf32>
    %95 = vector.shape_cast %94 : vector<16xf32> to vector<16x1xf32>
    %cst_38 = arith.constant 3.200000e+01 : f32
    %96 = vector.broadcast %cst_38 : f32 to vector<16x1xf32>
    %97 = arith.divf %95, %96 : vector<16x1xf32>
    %98 = vector.broadcast %97 : vector<16x1xf32> to vector<16x32xf32>
    %99 = arith.subf %93, %98 : vector<16x32xf32>
    %100 = arith.mulf %99, %99 : vector<16x32xf32>
    %cst_39 = arith.constant dense<0.000000e+00> : vector<16xf32>
    %101 = vector.multi_reduction <add>, %100, %cst_39 [1] : vector<16x32xf32> to vector<16xf32>
    %102 = vector.shape_cast %101 : vector<16xf32> to vector<16x1xf32>
    %cst_40 = arith.constant 3.200000e+01 : f32
    %103 = vector.broadcast %cst_40 : f32 to vector<16x1xf32>
    %104 = arith.divf %102, %103 : vector<16x1xf32>
    %105 = vector.broadcast %97 : vector<16x1xf32> to vector<16x32xf32>
    %106 = arith.subf %93, %105 : vector<16x32xf32>
    %cst_41 = arith.constant 9.99999996E-13 : f32
    %107 = vector.broadcast %cst_41 : f32 to vector<16x1xf32>
    %108 = arith.addf %104, %107 : vector<16x1xf32>
    %109 = math.rsqrt %108 : vector<16x1xf32>
    %110 = vector.broadcast %109 : vector<16x1xf32> to vector<16x32xf32>
    %111 = arith.mulf %106, %110 : vector<16x32xf32>
    %112 = vector.broadcast %10 : vector<1x32xf32> to vector<16x32xf32>
    %113 = arith.mulf %111, %112 : vector<16x32xf32>
    %114 = vector.broadcast %11 : vector<1x32xf32> to vector<16x32xf32>
    %115 = arith.addf %113, %114 : vector<16x32xf32>
    %c0_42 = arith.constant 0 : index
    %c0_43 = arith.constant 0 : index
    %116 = vector.load %arg8[%c0_42, %c0_43] : memref<32x128xf32, #tpu.memory_space<vmem>>, vector<32x128xf32>
    %cst_44 = arith.constant dense<0.000000e+00> : vector<16x128xf32>
    %117 = tpu.matmul %115, %116, %cst_44 {dimension_numbers = #tpu.dot_dimension_numbers<[1], [0], [0], [1], [0, 0, 1, 1], [], []>} : vector<16x32xf32>, vector<32x128xf32>, vector<16x128xf32> -> vector<16x128xf32>
    %c0_45 = arith.constant 0 : index
    %c0_46 = arith.constant 0 : index
    %118 = vector.load %arg9[%c0_45, %c0_46] : memref<1x128xf32, #tpu.memory_space<vmem>>, vector<1x128xf32>
    %119 = vector.broadcast %118 : vector<1x128xf32> to vector<16x128xf32>
    %120 = arith.addf %117, %119 : vector<16x128xf32>
    %121 = vector.shape_cast %120 : vector<16x128xf32> to vector<2x8x128xf32>
    %c0_47 = arith.constant 0 : index
    %c0_48 = arith.constant 0 : index
    %c0_49 = arith.constant 0 : index
    %122 = vector.load %arg13[%c0_47, %c0_48, %c0_49] : memref<2x8x128xf32, #tpu.memory_space<vmem>>, vector<2x8x128xf32>
    tpu.vector_store %arg13[%c0_47, %c0_48, %c0_49], %121 {strides = array<i32>} : memref<2x8x128xf32, #tpu.memory_space<vmem>>, vector<2x8x128xf32>,
    %c0_50 = arith.constant 0 : index
    %123 = memref.load %arg0[%c0_50] : memref<1xi32, #tpu.memory_space<smem>>
    %c0_51 = arith.constant 0 : index
    %c0_52 = arith.constant 0 : index
    %124 = vector.load %arg1[%c0_51, %c0_52] : memref<2x1xi32, #tpu.memory_space<vmem>>, vector<2x1xi32>
    %125 = tpu.iota {dimensions = array<i32: 1>} : vector<2x128xi32>
    %c7_i32 = arith.constant 7 : i32
    %126 = vector.broadcast %c7_i32 : i32 to vector<2x128xi32>
    %127 = arith.cmpi eq, %125, %126 : vector<2x128xi32>
    %cst_53 = arith.constant 0.000000e+00 : f32
    %cst_54 = arith.constant -1.000000e+04 : f32
    %128 = vector.broadcast %cst_53 : f32 to vector<2x128xf32>
    %129 = vector.broadcast %cst_54 : f32 to vector<2x128xf32>
    %130 = arith.select %127, %128, %129 : vector<2x128xi1>, vector<2x128xf32>
    %c0_55 = arith.constant 0 : index
    %c0_56 = arith.constant 0 : index
    %131 = vector.load %arg14[%c0_55, %c0_56] : memref<2x128xf32, #tpu.memory_space<vmem>>, vector<2x128xf32>
    tpu.vector_store %arg14[%c0_55, %c0_56], %130 {strides = array<i32>} : memref<2x128xf32, #tpu.memory_space<vmem>>, vector<2x128xf32>,
    %c0_57 = arith.constant 0 : index
    %c0_58 = arith.constant 0 : index
    %132 = vector.load %arg10[%c0_57, %c0_58] : memref<128x128xf32, #tpu.memory_space<vmem>>, vector<128x128xf32>
    %133 = tpu.iota {dimensions = array<i32: 2>} : vector<1x128x128xi32>
    %c0_i32 = arith.constant 0 : i32
    %134 = arith.subi %123, %c0_i32 : i32
    %c1_i32 = arith.constant 1 : i32
    %c1_i32_59 = arith.constant 1 : i32
    %135 = arith.subi %c1_i32, %c1_i32_59 : i32
    %136 = arith.addi %134, %135 : i32
    %c1_i32_60 = arith.constant 1 : i32
    %137 = arith.divsi %136, %c1_i32_60 : i32
    %c1_i32_61 = arith.constant 1 : i32
    %c0_i32_62 = arith.constant 0 : i32
    %c0_i32_63 = arith.constant 0 : i32
    %138 = arith.subi %137, %c0_i32_63 : i32
    %139 = arith.addi %c0_i32_63, %138 : i32
    %c1_i32_64 = arith.constant 1 : i32
    scf.for %arg15 = %c0_i32_63 to %139 step %c1_i32_64  : i32 {
      %145 = arith.muli %arg15, %c1_i32_61 : i32
      %146 = arith.addi %c0_i32_62, %145 : i32
      %c0_70 = arith.constant 0 : index
      %c0_71 = arith.constant 0 : index
      %147 = vector.load %arg14[%c0_70, %c0_71] : memref<2x128xf32, #tpu.memory_space<vmem>>, vector<2x128xf32>
      %148 = vector.shape_cast %147 : vector<2x128xf32> to vector<2x1x128xf32>
      %149 = vector.shape_cast %132 : vector<128x128xf32> to vector<1x128x128xf32>
      %150 = vector.broadcast %148 : vector<2x1x128xf32> to vector<2x128x128xf32>
      %151 = vector.broadcast %149 : vector<1x128x128xf32> to vector<2x128x128xf32>
      %152 = arith.addf %150, %151 : vector<2x128x128xf32>
      %cst_72 = arith.constant dense<0xFF800000> : vector<2x128xf32>
      %153 = vector.multi_reduction <maximumf>, %152, %cst_72 [2] : vector<2x128x128xf32> to vector<2x128xf32>
      %154 = vector.shape_cast %153 : vector<2x128xf32> to vector<2x128x1xf32>
      %155 = vector.broadcast %154 : vector<2x128x1xf32> to vector<2x128x128xf32>
      %156 = arith.cmpf oeq, %152, %155 : vector<2x128x128xf32>
      %c128_i32 = arith.constant 128 : i32
      %157 = vector.shape_cast %133 : vector<1x128x128xi32> to vector<1x128x128xi32>
      %158 = vector.broadcast %157 : vector<1x128x128xi32> to vector<2x128x128xi32>
      %159 = vector.broadcast %c128_i32 : i32 to vector<2x128x128xi32>
      %160 = arith.select %156, %158, %159 : vector<2x128x128xi1>, vector<2x128x128xi32>
      %cst_73 = arith.constant dense<2147483647> : vector<2x128xi32>
      %161 = vector.multi_reduction <minsi>, %160, %cst_73 [2] : vector<2x128x128xi32> to vector<2x128xi32>
      %c1_i32_74 = arith.constant 1 : i32
      %162 = arith.addi %146, %c1_i32_74 : i32
      %c0_75 = arith.constant 0 : index
      %163 = arith.index_cast %162 : i32 to index
      %c0_76 = arith.constant 0 : index
      %164 = vector.load %arg13[%c0_75, %163, %c0_76] : memref<2x8x128xf32, #tpu.memory_space<vmem>>, vector<2x1x128xf32>
      %165 = vector.shape_cast %164 : vector<2x1x128xf32> to vector<2x128xf32>
      %166 = vector.broadcast %146 : i32 to vector<2x1xi32>
      %167 = arith.cmpi slt, %166, %124 : vector<2x1xi32>
      %168 = arith.addf %153, %165 : vector<2x128xf32>
      %169 = vector.shape_cast %167 : vector<2x1xi1> to vector<2x1xi1>
      %170 = vector.broadcast %169 : vector<2x1xi1> to vector<2x128xi1>
      %171 = arith.select %170, %168, %147 : vector<2x128xi1>, vector<2x128xf32>
      %c0_77 = arith.constant 0 : index
      %c0_78 = arith.constant 0 : index
      %172 = vector.load %arg14[%c0_77, %c0_78] : memref<2x128xf32, #tpu.memory_space<vmem>>, vector<2x128xf32>
      tpu.vector_store %arg14[%c0_77, %c0_78], %171 {strides = array<i32>} : memref<2x128xf32, #tpu.memory_space<vmem>>, vector<2x128xf32>,
      %173 = vector.shape_cast %161 : vector<2x128xi32> to vector<2x1x128xi32>
      %c0_79 = arith.constant 0 : index
      %174 = arith.index_cast %146 : i32 to index
      %c0_80 = arith.constant 0 : index
      %175 = vector.load %arg11[%c0_79, %174, %c0_80] : memref<2x7x128xi32, #tpu.memory_space<vmem>>, vector<2x1x128xi32>
      tpu.vector_store %arg11[%c0_79, %174, %c0_80], %173 {strides = array<i32>} : memref<2x7x128xi32, #tpu.memory_space<vmem>>, vector<2x1x128xi32>,
    }
    %c0_65 = arith.constant 0 : index
    %c0_66 = arith.constant 0 : index
    %140 = vector.load %arg14[%c0_65, %c0_66] : memref<2x128xf32, #tpu.memory_space<vmem>>, vector<2x128xf32>
    %c8 = arith.constant 8 : index
    %c0_67 = arith.constant 0 : index
    %141 = vector.load %arg10[%c8, %c0_67] : memref<128x128xf32, #tpu.memory_space<vmem>>, vector<1x128xf32>
    %142 = vector.broadcast %141 : vector<1x128xf32> to vector<2x128xf32>
    %143 = arith.addf %140, %142 : vector<2x128xf32>
    %c0_68 = arith.constant 0 : index
    %c0_69 = arith.constant 0 : index
    %144 = vector.load %arg12[%c0_68, %c0_69] : memref<2x128xf32, #tpu.memory_space<vmem>>, vector<2x128xf32>
    tpu.vector_store %arg12[%c0_68, %c0_69], %143 {strides = array<i32>} : memref<2x128xf32, #tpu.memory_space<vmem>>, vector<2x128xf32>,
    return
  }
}

</mosaic_0001>

<llo_original>
// kernel: tpu_custom_call.1
$region0: #{tpu_custom_call.1}
  #allocation0 [shape = 'u32[]', space=smem, size = 0x4, offset = 0x4, fixed_abs, tag = 'smem constant byte address 0x4 - core index']
  #allocation1 [shape = 'u32[144,128]{1,0:T(1,128)}', space=vmem, size = 0x12000, scoped, tag = 'internal scratch']
  #allocation2 [shape = 'f32[2,8,128]{2,1,0:T(8,128)}', space=vmem, size = 0x2000, scoped, tag = 'scratch operand']
  #allocation3 [shape = 'f32[2,128]{1,0:T(2,128)}', space=vmem, size = 0x400, scoped, tag = 'scratch operand']
  #allocation4 [shape = 's32[1]{0:T(128)S(6)}', space=smem, size = 0x200, scoped, tag = 'scoped memory for tpu_custom_call.1']
  %s0 = inlined_call_operand.<no memory space> [shape: s32[1], index: 0, kind: input, shape index: {}]
  %s1 = inlined_call_operand.vmem [shape: s32[2,1], index: 1, kind: input, shape index: {}]
  %s2 = inlined_call_operand.hbm [shape: f32[2,8,32], index: 2, kind: input, shape index: {}]
  %s3 = inlined_call_operand.hbm [shape: f32[4,32,32], index: 3, kind: input, shape index: {}]
  %s4 = inlined_call_operand.hbm [shape: f32[9,32], index: 4, kind: input, shape index: {}]
  %s5 = inlined_call_operand.hbm [shape: f32[32,64], index: 5, kind: input, shape index: {}]
  %s6 = inlined_call_operand.vmem [shape: f32[1,64], index: 6, kind: input, shape index: {}]
  %s7 = inlined_call_operand.vmem [shape: f32[64,32], index: 7, kind: input, shape index: {}]
  %s8 = inlined_call_operand.hbm [shape: f32[32,128], index: 8, kind: input, shape index: {}]
  %s9 = inlined_call_operand.vmem [shape: f32[1,128], index: 9, kind: input, shape index: {}]
  %s10 = inlined_call_operand.vmem [shape: f32[128,128], index: 10, kind: input, shape index: {}]
  %s11 = inlined_call_operand.vmem [shape: s32[2,7,128], index: 11, kind: output, shape index: {0}]
  %s12 = inlined_call_operand.hbm [shape: f32[2,128], index: 12, kind: output, shape index: {1}]
  %13 = xla_tuple %s11, %s12
  %s14 = sld [smem:[#allocation0]]
  $region89: #{tpu_custom_call.1} parent=0
    _
  %s16 = ssub.s32 1, %s14
  %s17 = scalar_select 0, %s16, %s14
  %18 = sst [smem:[#allocation4]] %s0
  $region1: #{tpu_custom_call.1} parent=0
    #allocation5 [shape = 'u8[8192]{0}', space=vmem, size = 0x2000, scoped, tag = 'input window, operand 2, single buffered']
    #allocation6 [shape = 's32[1]{0}', space=sflag, size = 0x4, scoped, tag = 'scoped memory for tpu_custom_call.1']
    #allocation7 [shape = 's32[1]{0}', space=sflag, size = 0x4, scoped, tag = 'scoped memory for tpu_custom_call.1']
    #allocation8 [shape = 'u8[65536]{0}', space=vmem, size = 0x10000, scoped, tag = 'input window, operand 3, single buffered']
    #allocation9 [shape = 's32[1]{0}', space=sflag, size = 0x4, scoped, tag = 'scoped memory for tpu_custom_call.1']
    #allocation10 [shape = 'u8[8192]{0}', space=vmem, size = 0x2000, scoped, tag = 'input window, operand 4, single buffered']
    #allocation11 [shape = 'u8[16384]{0}', space=vmem, size = 0x4000, scoped, tag = 'input window, operand 5, single buffered']
    #allocation12 [shape = 's32[1]{0}', space=sflag, size = 0x4, scoped, tag = 'scoped memory for tpu_custom_call.1']
    #allocation13 [shape = 'u8[16384]{0}', space=vmem, size = 0x4000, scoped, tag = 'input window, operand 8, single buffered']
    #allocation14 [shape = 'u8[1024]{0}', space=vmem, size = 0x400, scoped, tag = 'output window, operand 1, single buffered']
    %19 = vsyncpa [#allocation6], 0
    %20 = vsyncpa [#allocation9], 0
    %21 = vsyncpa [#allocation12], 0
    %22 = vsyncpa [#allocation7], 0
    // Predicated region
    $region2: #{tpu_custom_call.1} parent=1 // pred_check
      _
    $region3: #{tpu_custom_call.1} parent=1 // pred_check_branch
      %24 = sbr.rel (0) target = $region5
    $region4: #{tpu_custom_call.1} parent=1 // pred_region
      _
    $region5: #{tpu_custom_call.1} parent=1 // pred_fallthru
      _
    // Predicated region
    $region6: #{tpu_custom_call.1} parent=1 // pred_check
      _
    $region7: #{tpu_custom_call.1} parent=1 // pred_check_branch
      %26 = sbr.rel (0) target = $region9
    $region8: #{tpu_custom_call.1} parent=1 // pred_region
      _
    $region9: #{tpu_custom_call.1} parent=1 // pred_fallthru
      _
    // Predicated region
    $region10: #{tpu_custom_call.1} parent=1 // pred_check
      _
    $region11: #{tpu_custom_call.1} parent=1 // pred_check_branch
      %28 = sbr.rel (0) target = $region13
    $region12: #{tpu_custom_call.1} parent=1 // pred_region
      %s30 = ssub.s32 256, 256
      %31 = vsyncadd [#allocation6], %s30
      %s32 = sshll.u32 [#allocation5], 4
      %s33 = int_to_ptr.vmem [resolvable:$true] %s32
      %38 = dma.hbm_to_vmem [thread:$0]  %s2, 256, %s33, [#allocation6], 128, 128, 8
    $region13: #{tpu_custom_call.1} parent=1 // pred_fallthru
      _
    // Predicated region
    $region14: #{tpu_custom_call.1} parent=1 // pred_check
      _
    $region15: #{tpu_custom_call.1} parent=1 // pred_check_branch
      %40 = sbr.rel (0) target = $region17
    $region16: #{tpu_custom_call.1} parent=1 // pred_region
      %s42 = ssub.s32 2048, 2048
      %43 = vsyncadd [#allocation9], %s42
      %s44 = sshll.u32 [#allocation8], 4
      %s45 = int_to_ptr.vmem [resolvable:$true] %s44
      %50 = dma.hbm_to_vmem [thread:$0]  %s3, 2048, %s45, [#allocation9], 128, 128, 8
    $region17: #{tpu_custom_call.1} parent=1 // pred_fallthru
      _
    // Predicated region
    $region18: #{tpu_custom_call.1} parent=1 // pred_check
      _
    $region19: #{tpu_custom_call.1} parent=1 // pred_check_branch
      %52 = sbr.rel (0) target = $region21
    $region20: #{tpu_custom_call.1} parent=1 // pred_region
      %s54 = ssub.s32 256, 256
      %55 = vsyncadd [#allocation9], %s54
      %s56 = sshll.u32 [#allocation10], 4
      %s57 = int_to_ptr.vmem [resolvable:$true] %s56
      %62 = dma.hbm_to_vmem [thread:$0]  %s4, 256, %s57, [#allocation9], 128, 128, 8
    $region21: #{tpu_custom_call.1} parent=1 // pred_fallthru
      _
    // Predicated region
    $region22: #{tpu_custom_call.1} parent=1 // pred_check
      _
    $region23: #{tpu_custom_call.1} parent=1 // pred_check_branch
      %64 = sbr.rel (0) target = $region25
    $region24: #{tpu_custom_call.1} parent=1 // pred_region
      %s66 = ssub.s32 512, 512
      %67 = vsyncadd [#allocation12], %s66
      %s68 = sshll.u32 [#allocation11], 4
      %s69 = int_to_ptr.vmem [resolvable:$true] %s68
      %74 = dma.hbm_to_vmem [thread:$0]  %s5, 512, %s69, [#allocation12], 128, 128, 8
    $region25: #{tpu_custom_call.1} parent=1 // pred_fallthru
      _
    // Predicated region
    $region26: #{tpu_custom_call.1} parent=1 // pred_check
      _
    $region27: #{tpu_custom_call.1} parent=1 // pred_check_branch
      %76 = sbr.rel (0) target = $region29
    $region28: #{tpu_custom_call.1} parent=1 // pred_region
      _
    $region29: #{tpu_custom_call.1} parent=1 // pred_fallthru
      _
    // Predicated region
    $region30: #{tpu_custom_call.1} parent=1 // pred_check
      _
    $region31: #{tpu_custom_call.1} parent=1 // pred_check_branch
      %78 = sbr.rel (0) target = $region33
    $region32: #{tpu_custom_call.1} parent=1 // pred_region
      _
    $region33: #{tpu_custom_call.1} parent=1 // pred_fallthru
      _
    // Predicated region
    $region34: #{tpu_custom_call.1} parent=1 // pred_check
      _
    $region35: #{tpu_custom_call.1} parent=1 // pred_check_branch
      %80 = sbr.rel (0) target = $region37
    $region36: #{tpu_custom_call.1} parent=1 // pred_region
      %s82 = ssub.s32 512, 512
      %83 = vsyncadd [#allocation12], %s82
      %s84 = sshll.u32 [#allocation13], 4
      %s85 = int_to_ptr.vmem [resolvable:$true] %s84
      %90 = dma.hbm_to_vmem [thread:$0]  %s8, 512, %s85, [#allocation12], 128, 128, 8
    $region37: #{tpu_custom_call.1} parent=1 // pred_fallthru
      _
    // Predicated region
    $region38: #{tpu_custom_call.1} parent=1 // pred_check
      _
    $region39: #{tpu_custom_call.1} parent=1 // pred_check_branch
      %92 = sbr.rel (0) target = $region41
    $region40: #{tpu_custom_call.1} parent=1 // pred_region
      _
    $region41: #{tpu_custom_call.1} parent=1 // pred_fallthru
      _
    // Predicated region
    $region42: #{tpu_custom_call.1} parent=1 // pred_check
      _
    $region43: #{tpu_custom_call.1} parent=1 // pred_check_branch
      %94 = sbr.rel (0) target = $region45
    $region44: #{tpu_custom_call.1} parent=1 // pred_region
      _
    $region45: #{tpu_custom_call.1} parent=1 // pred_fallthru
      _
    // Predicated region
    $region46: #{tpu_custom_call.1} parent=1 // pred_check
      _
    $region47: #{tpu_custom_call.1} parent=1 // pred_check_branch
      %96 = sbr.rel (0) target = $region49
    $region48: #{tpu_custom_call.1} parent=1 // pred_region
      %97 = dma.done [#allocation6], 256
    $region49: #{tpu_custom_call.1} parent=1 // pred_fallthru
      _
    // Predicated region
    $region50: #{tpu_custom_call.1} parent=1 // pred_check
      _
    $region51: #{tpu_custom_call.1} parent=1 // pred_check_branch
      %99 = sbr.rel (0) target = $region53
    $region52: #{tpu_custom_call.1} parent=1 // pred_region
      %100 = dma.done [#allocation9], 2048
    $region53: #{tpu_custom_call.1} parent=1 // pred_fallthru
      _
    // Predicated region
    $region54: #{tpu_custom_call.1} parent=1 // pred_check
      _
    $region55: #{tpu_custom_call.1} parent=1 // pred_check_branch
      %102 = sbr.rel (0) target = $region57
    $region56: #{tpu_custom_call.1} parent=1 // pred_region
      %103 = dma.done [#allocation9], 256
    $region57: #{tpu_custom_call.1} parent=1 // pred_fallthru
      _
    // Predicated region
    $region58: #{tpu_custom_call.1} parent=1 // pred_check
      _
    $region59: #{tpu_custom_call.1} parent=1 // pred_check_branch
      %105 = sbr.rel (0) target = $region61
    $region60: #{tpu_custom_call.1} parent=1 // pred_region
      %106 = dma.done [#allocation12], 512
    $region61: #{tpu_custom_call.1} parent=1 // pred_fallthru
      _
    // Predicated region
    $region62: #{tpu_custom_call.1} parent=1 // pred_check
      _
    $region63: #{tpu_custom_call.1} parent=1 // pred_check_branch
      %108 = sbr.rel (0) target = $region65
    $region64: #{tpu_custom_call.1} parent=1 // pred_region
      %109 = dma.done [#allocation12], 512
    $region65: #{tpu_custom_call.1} parent=1 // pred_fallthru
      _
    %v110 = vld [vmem:[#allocation5] sm:$0xff]
    %v111 = vld [vmem:[#allocation5 + $0x8] sm:$0xff]
    %v112 = vld [vmem:[#allocation10] sm:$0xff]
    %v113 = vld [vmem:[#allocation10 + $0x8] sm:$0x1]
    %v114 = vld [vmem:[#allocation8] sm:$0xff]
    %v115 = vld [vmem:[#allocation8 + $0x8] sm:$0xff]
    %v116 = vld [vmem:[#allocation8 + $0x10] sm:$0xff]
    %v117 = vld [vmem:[#allocation8 + $0x18] sm:$0xff]
    %v118 = vlaneseq
    %v119 = vshrl.u32 %v118, 7
    %v120 = vsub.s32 0, %v119
    %v121 = vrot.slane %v112, %v120
    %vm122 = vcmask 261120
    %v124 = vsel %vm122, %v110, 0
    %v127 = vsel %vm122, %v111, 0
    %129 = vmatprep.subr.mxu0 0.0
    %130 = vmatpush1.msra.mxu0 %v114
    %131 = vmatprep.subr.mxu0 0.0
    %132 = vmatpush1.msra.mxu0 %v115
    %133 = vmatprep.subr.mxu0 0.0
    %134 = vmatpush1.msra.mxu0 %v116
    %135 = vmatprep.subr.mxu0 0.0
    %136 = vmatpush1.msra.mxu0 %v117
    %137 = vmatprep.subr.mxu0 0.0
    %138 = vmatpush1.msra.mxu0 0.0
    %139 = vmatprep.subr.mxu0 0.0
    %140 = vmatpush1.msra.mxu0 0.0
    %141 = vmatprep.subr.mxu0 0.0
    %142 = vmatpush1.msra.mxu0 0.0
    %143 = vmatprep.subr.mxu0 0.0
    %144 = vmatpush1.msra.mxu0 0.0
    %145 = vmatprep.subr.mxu0 0.0
    %146 = vmatpush1.msra.mxu0 0.0
    %147 = vmatprep.subr.mxu0 0.0
    %148 = vmatpush1.msra.mxu0 0.0
    %149 = vmatprep.subr.mxu0 0.0
    %150 = vmatpush1.msra.mxu0 0.0
    %151 = vmatprep.subr.mxu0 0.0
    %152 = vmatpush1.msra.mxu0 0.0
    %153 = vmatprep.subr.mxu0 0.0
    %154 = vmatpush1.msra.mxu0 0.0
    %155 = vmatprep.subr.mxu0 0.0
    %156 = vmatpush1.msra.mxu0 0.0
    %157 = vmatprep.subr.mxu0 0.0
    %158 = vmatpush1.msra.mxu0 0.0
    %159 = vmatprep.subr.mxu0 0.0
    %160 = vmatpush1.msra.mxu0 0.0
    %161 = vmatprep.subr.mxu0 0.0
    %162 = vmatpush1.msra.mxu0 0.0
    %163 = vmatprep.subr.mxu0 0.0
    %164 = vmatpush1.msra.mxu0 0.0
    %165 = vmatprep.subr.mxu0 0.0
    %166 = vmatpush1.msra.mxu0 0.0
    %167 = vmatprep.subr.mxu0 0.0
    %168 = vmatpush1.msra.mxu0 0.0
    %169 = vmatprep.subr.mxu0 0.0
    %170 = vmatpush1.msra.mxu0 0.0
    %171 = vmatprep.subr.mxu0 0.0
    %172 = vmatpush1.msra.mxu0 0.0
    %173 = vmatprep.subr.mxu0 0.0
    %174 = vmatpush1.msra.mxu0 0.0
    %175 = vmatprep.subr.mxu0 0.0
    %176 = vmatpush1.msra.mxu0 0.0
    %177 = vmatprep.subr.mxu0 0.0
    %178 = vmatpush1.msra.mxu0 0.0
    %179 = vmatprep.subr.mxu0 0.0
    %180 = vmatpush1.msra.mxu0 0.0
    %181 = vmatprep.subr.mxu0 0.0
    %182 = vmatpush1.msra.mxu0 0.0
    %183 = vmatprep.subr.mxu0 0.0
    %184 = vmatpush1.msra.mxu0 0.0
    %185 = vmatprep.subr.mxu0 0.0
    %186 = vmatpush1.msra.mxu0 0.0
    %187 = vmatprep.subr.mxu0 0.0
    %188 = vmatpush1.msra.mxu0 0.0
    %189 = vmatprep.subr.mxu0 0.0
    %190 = vmatpush1.msra.mxu0 0.0
    %191 = vmatprep.subr.mxu0 0.0
    %192 = vmatpush1.msra.mxu0 0.0
    %193 = vmatprep.mubr.f32.mxu0 0.0
    %194 = vmatmul.mubr.f32.gmra.mrb[0].mxu0 %v124
    %v195 = vpop.f32.mrb[0].mxu0
    %v196 = vadd.f32 %v121, %v195
    %v197 = vpop.f32.mrb[0].mxu0
    %198 = vmatprep.mubr.f32.mxu0 0.0
    %199 = vmatmul.mubr.f32.gmra.mrb[0].mxu0 %v127
    %v200 = vpop.f32.mrb[0].mxu0
    %v201 = vadd.f32 %v121, %v200
    %v202 = vpop.f32.mrb[0].mxu0
    %203 = vdwg.mxu0
    %s204 = scalar_lea.vmem [#allocation8], 32
    %v205 = vld [vmem:[%s204] sm:$0xff]
    %v206 = vld [vmem:[%s204 + $0x8] sm:$0xff]
    %v207 = vld [vmem:[%s204 + $0x10] sm:$0xff]
    %v208 = vld [vmem:[%s204 + $0x18] sm:$0xff]
    %v209 = vlaneseq
    %v210 = vshrl.u32 %v209, 7
    %v211 = vsub.s32 1, %v210
    %v212 = vrot.slane %v112, %v211
    %213 = vmatprep.subr.mxu0 0.0
    %214 = vmatpush1.msra.mxu0 %v205
    %215 = vmatprep.subr.mxu0 0.0
    %216 = vmatpush1.msra.mxu0 %v206
    %217 = vmatprep.subr.mxu0 0.0
    %218 = vmatpush1.msra.mxu0 %v207
    %219 = vmatprep.subr.mxu0 0.0
    %220 = vmatpush1.msra.mxu0 %v208
    %221 = vmatprep.subr.mxu0 0.0
    %222 = vmatpush1.msra.mxu0 0.0
    %223 = vmatprep.subr.mxu0 0.0
    %224 = vmatpush1.msra.mxu0 0.0
    %225 = vmatprep.subr.mxu0 0.0
    %226 = vmatpush1.msra.mxu0 0.0
    %227 = vmatprep.subr.mxu0 0.0
    %228 = vmatpush1.msra.mxu0 0.0
    %229 = vmatprep.subr.mxu0 0.0
    %230 = vmatpush1.msra.mxu0 0.0
    %231 = vmatprep.subr.mxu0 0.0
    %232 = vmatpush1.msra.mxu0 0.0
    %233 = vmatprep.subr.mxu0 0.0
    %234 = vmatpush1.msra.mxu0 0.0
    %235 = vmatprep.subr.mxu0 0.0
    %236 = vmatpush1.msra.mxu0 0.0
    %237 = vmatprep.subr.mxu0 0.0
    %238 = vmatpush1.msra.mxu0 0.0
    %239 = vmatprep.subr.mxu0 0.0
    %240 = vmatpush1.msra.mxu0 0.0
    %241 = vmatprep.subr.mxu0 0.0
    %242 = vmatpush1.msra.mxu0 0.0
    %243 = vmatprep.subr.mxu0 0.0
    %244 = vmatpush1.msra.mxu0 0.0
    %245 = vmatprep.subr.mxu0 0.0
    %246 = vmatpush1.msra.mxu0 0.0
    %247 = vmatprep.subr.mxu0 0.0
    %248 = vmatpush1.msra.mxu0 0.0
    %249 = vmatprep.subr.mxu0 0.0
    %250 = vmatpush1.msra.mxu0 0.0
    %251 = vmatprep.subr.mxu0 0.0
    %252 = vmatpush1.msra.mxu0 0.0
    %253 = vmatprep.subr.mxu0 0.0
    %254 = vmatpush1.msra.mxu0 0.0
    %255 = vmatprep.subr.mxu0 0.0
    %256 = vmatpush1.msra.mxu0 0.0
    %257 = vmatprep.subr.mxu0 0.0
    %258 = vmatpush1.msra.mxu0 0.0
    %259 = vmatprep.subr.mxu0 0.0
    %260 = vmatpush1.msra.mxu0 0.0
    %261 = vmatprep.subr.mxu0 0.0
    %262 = vmatpush1.msra.mxu0 0.0
    %263 = vmatprep.subr.mxu0 0.0
    %264 = vmatpush1.msra.mxu0 0.0
    %265 = vmatprep.subr.mxu0 0.0
    %266 = vmatpush1.msra.mxu0 0.0
    %267 = vmatprep.subr.mxu0 0.0
    %268 = vmatpush1.msra.mxu0 0.0
    %269 = vmatprep.subr.mxu0 0.0
    %270 = vmatpush1.msra.mxu0 0.0
    %271 = vmatprep.subr.mxu0 0.0
    %272 = vmatpush1.msra.mxu0 0.0
    %273 = vmatprep.subr.mxu0 0.0
    %274 = vmatpush1.msra.mxu0 0.0
    %275 = vmatprep.subr.mxu0 0.0
    %276 = vmatpush1.msra.mxu0 0.0
    %277 = vmatprep.mubr.f32.mxu0 0.0
    %278 = vmatmul.mubr.f32.gmra.mrb[0].mxu0 %v124
    %v279 = vpop.f32.mrb[0].mxu0
    %v280 = vadd.f32 %v212, %v279
    %v281 = vpop.f32.mrb[0].mxu0
    %282 = vmatprep.mubr.f32.mxu0 0.0
    %283 = vmatmul.mubr.f32.gmra.mrb[0].mxu0 %v127
    %v284 = vpop.f32.mrb[0].mxu0
    %v285 = vadd.f32 %v212, %v284
    %v286 = vpop.f32.mrb[0].mxu0
    %287 = vdwg.mxu0
    %s288 = scalar_lea.vmem [#allocation8], 64
    %v289 = vld [vmem:[%s288] sm:$0xff]
    %v290 = vld [vmem:[%s288 + $0x8] sm:$0xff]
    %v291 = vld [vmem:[%s288 + $0x10] sm:$0xff]
    %v292 = vld [vmem:[%s288 + $0x18] sm:$0xff]
    %v293 = vlaneseq
    %v294 = vshrl.u32 %v293, 7
    %v295 = vsub.s32 2, %v294
    %v296 = vrot.slane %v112, %v295
    %297 = vmatprep.subr.mxu0 0.0
    %298 = vmatpush1.msra.mxu0 %v289
    %299 = vmatprep.subr.mxu0 0.0
    %300 = vmatpush1.msra.mxu0 %v290
    %301 = vmatprep.subr.mxu0 0.0
    %302 = vmatpush1.msra.mxu0 %v291
    %303 = vmatprep.subr.mxu0 0.0
    %304 = vmatpush1.msra.mxu0 %v292
    %305 = vmatprep.subr.mxu0 0.0
    %306 = vmatpush1.msra.mxu0 0.0
    %307 = vmatprep.subr.mxu0 0.0
    %308 = vmatpush1.msra.mxu0 0.0
    %309 = vmatprep.subr.mxu0 0.0
    %310 = vmatpush1.msra.mxu0 0.0
    %311 = vmatprep.subr.mxu0 0.0
    %312 = vmatpush1.msra.mxu0 0.0
    %313 = vmatprep.subr.mxu0 0.0
    %314 = vmatpush1.msra.mxu0 0.0
    %315 = vmatprep.subr.mxu0 0.0
    %316 = vmatpush1.msra.mxu0 0.0
    %317 = vmatprep.subr.mxu0 0.0
    %318 = vmatpush1.msra.mxu0 0.0
    %319 = vmatprep.subr.mxu0 0.0
    %320 = vmatpush1.msra.mxu0 0.0
    %321 = vmatprep.subr.mxu0 0.0
    %322 = vmatpush1.msra.mxu0 0.0
    %323 = vmatprep.subr.mxu0 0.0
    %324 = vmatpush1.msra.mxu0 0.0
    %325 = vmatprep.subr.mxu0 0.0
    %326 = vmatpush1.msra.mxu0 0.0
    %327 = vmatprep.subr.mxu0 0.0
    %328 = vmatpush1.msra.mxu0 0.0
    %329 = vmatprep.subr.mxu0 0.0
    %330 = vmatpush1.msra.mxu0 0.0
    %331 = vmatprep.subr.mxu0 0.0
    %332 = vmatpush1.msra.mxu0 0.0
    %333 = vmatprep.subr.mxu0 0.0
    %334 = vmatpush1.msra.mxu0 0.0
    %335 = vmatprep.subr.mxu0 0.0
    %336 = vmatpush1.msra.mxu0 0.0
    %337 = vmatprep.subr.mxu0 0.0
    %338 = vmatpush1.msra.mxu0 0.0
    %339 = vmatprep.subr.mxu0 0.0
    %340 = vmatpush1.msra.mxu0 0.0
    %341 = vmatprep.subr.mxu0 0.0
    %342 = vmatpush1.msra.mxu0 0.0
    %343 = vmatprep.subr.mxu0 0.0
    %344 = vmatpush1.msra.mxu0 0.0
    %345 = vmatprep.subr.mxu0 0.0
    %346 = vmatpush1.msra.mxu0 0.0
    %347 = vmatprep.subr.mxu0 0.0
    %348 = vmatpush1.msra.mxu0 0.0
    %349 = vmatprep.subr.mxu0 0.0
    %350 = vmatpush1.msra.mxu0 0.0
    %351 = vmatprep.subr.mxu0 0.0
    %352 = vmatpush1.msra.mxu0 0.0
    %353 = vmatprep.subr.mxu0 0.0
    %354 = vmatpush1.msra.mxu0 0.0
    %355 = vmatprep.subr.mxu0 0.0
    %356 = vmatpush1.msra.mxu0 0.0
    %357 = vmatprep.subr.mxu0 0.0
    %358 = vmatpush1.msra.mxu0 0.0
    %359 = vmatprep.subr.mxu0 0.0
    %360 = vmatpush1.msra.mxu0 0.0
    %361 = vmatprep.mubr.f32.mxu0 0.0
    %362 = vmatmul.mubr.f32.gmra.mrb[0].mxu0 %v124
    %v363 = vpop.f32.mrb[0].mxu0
    %v364 = vadd.f32 %v296, %v363
    %v365 = vpop.f32.mrb[0].mxu0
    %366 = vmatprep.mubr.f32.mxu0 0.0
    %367 = vmatmul.mubr.f32.gmra.mrb[0].mxu0 %v127
    %v368 = vpop.f32.mrb[0].mxu0
    %v369 = vadd.f32 %v296, %v368
    %v370 = vpop.f32.mrb[0].mxu0
    %371 = vdwg.mxu0
    %v373 = vsel %vm122, %v196, 0
    %v376 = vsel %vm122, %v280, 0
    %378 = vmatprep.subr.mxu0 0.0
    %379 = vmatpush1.xpose.msra.mxu0 %v376
    %380 = vmatprep.subr.mxu0 0.0
    %381 = vmatpush1.xpose.msra.mxu0 0.0
    %382 = vmatprep.subr.mxu0 0.0
    %383 = vmatpush1.xpose.msra.mxu0 0.0
    %384 = vmatprep.subr.mxu0 0.0
    %385 = vmatpush1.xpose.msra.mxu0 0.0
    %386 = vmatprep.subr.mxu0 0.0
    %387 = vmatpush1.xpose.msra.mxu0 0.0
    %388 = vmatprep.subr.mxu0 0.0
    %389 = vmatpush1.xpose.msra.mxu0 0.0
    %390 = vmatprep.subr.mxu0 0.0
    %391 = vmatpush1.xpose.msra.mxu0 0.0
    %392 = vmatprep.subr.mxu0 0.0
    %393 = vmatpush1.xpose.msra.mxu0 0.0
    %394 = vmatprep.subr.mxu0 0.0
    %395 = vmatpush1.xpose.msra.mxu0 0.0
    %396 = vmatprep.subr.mxu0 0.0
    %397 = vmatpush1.xpose.msra.mxu0 0.0
    %398 = vmatprep.subr.mxu0 0.0
    %399 = vmatpush1.xpose.msra.mxu0 0.0
    %400 = vmatprep.subr.mxu0 0.0
    %401 = vmatpush1.xpose.msra.mxu0 0.0
    %402 = vmatprep.subr.mxu0 0.0
    %403 = vmatpush1.xpose.msra.mxu0 0.0
    %404 = vmatprep.subr.mxu0 0.0
    %405 = vmatpush1.xpose.msra.mxu0 0.0
    %406 = vmatprep.subr.mxu0 0.0
    %407 = vmatpush1.xpose.msra.mxu0 0.0
    %408 = vmatprep.subr.mxu0 0.0
    %409 = vmatpush1.xpose.msra.mxu0 0.0
    %410 = vmatprep.subr.mxu0 0.0
    %411 = vmatpush1.xpose.msra.mxu0 0.0
    %412 = vmatprep.subr.mxu0 0.0
    %413 = vmatpush1.xpose.msra.mxu0 0.0
    %414 = vmatprep.subr.mxu0 0.0
    %415 = vmatpush1.xpose.msra.mxu0 0.0
    %416 = vmatprep.subr.mxu0 0.0
    %417 = vmatpush1.xpose.msra.mxu0 0.0
    %418 = vmatprep.subr.mxu0 0.0
    %419 = vmatpush1.xpose.msra.mxu0 0.0
    %420 = vmatprep.subr.mxu0 0.0
    %421 = vmatpush1.xpose.msra.mxu0 0.0
    %422 = vmatprep.subr.mxu0 0.0
    %423 = vmatpush1.xpose.msra.mxu0 0.0
    %424 = vmatprep.subr.mxu0 0.0
    %425 = vmatpush1.xpose.msra.mxu0 0.0
    %426 = vmatprep.subr.mxu0 0.0
    %427 = vmatpush1.xpose.msra.mxu0 0.0
    %428 = vmatprep.subr.mxu0 0.0
    %429 = vmatpush1.xpose.msra.mxu0 0.0
    %430 = vmatprep.subr.mxu0 0.0
    %431 = vmatpush1.xpose.msra.mxu0 0.0
    %432 = vmatprep.subr.mxu0 0.0
    %433 = vmatpush1.xpose.msra.mxu0 0.0
    %434 = vmatprep.subr.mxu0 0.0
    %435 = vmatpush1.xpose.msra.mxu0 0.0
    %436 = vmatprep.subr.mxu0 0.0
    %437 = vmatpush1.xpose.msra.mxu0 0.0
    %438 = vmatprep.subr.mxu0 0.0
    %439 = vmatpush1.xpose.msra.mxu0 0.0
    %440 = vmatprep.subr.mxu0 0.0
    %441 = vmatpush1.xpose.msra.mxu0 0.0
    %442 = vmatprep.mubr.f32.mxu0 0.0
    %443 = vmatmul.mubr.f32.gmra.mrb[0].mxu0 %v373
    %v444 = vpop.f32.mrb[0].mxu0
    %v445 = vadd.f32 0.0, %v444
    %v446 = vpop.f32.mrb[0].mxu0
    %447 = vdwg.mxu0
    %v449 = vsel %vm122, %v201, 0
    %v452 = vsel %vm122, %v285, 0
    %454 = vmatprep.subr.mxu0 0.0
    %455 = vmatpush1.xpose.msra.mxu0 %v452
    %456 = vmatprep.subr.mxu0 0.0
    %457 = vmatpush1.xpose.msra.mxu0 0.0
    %458 = vmatprep.subr.mxu0 0.0
    %459 = vmatpush1.xpose.msra.mxu0 0.0
    %460 = vmatprep.subr.mxu0 0.0
    %461 = vmatpush1.xpose.msra.mxu0 0.0
    %462 = vmatprep.subr.mxu0 0.0
    %463 = vmatpush1.xpose.msra.mxu0 0.0
    %464 = vmatprep.subr.mxu0 0.0
    %465 = vmatpush1.xpose.msra.mxu0 0.0
    %466 = vmatprep.subr.mxu0 0.0
    %467 = vmatpush1.xpose.msra.mxu0 0.0
    %468 = vmatprep.subr.mxu0 0.0
    %469 = vmatpush1.xpose.msra.mxu0 0.0
    %470 = vmatprep.subr.mxu0 0.0
    %471 = vmatpush1.xpose.msra.mxu0 0.0
    %472 = vmatprep.subr.mxu0 0.0
    %473 = vmatpush1.xpose.msra.mxu0 0.0
    %474 = vmatprep.subr.mxu0 0.0
    %475 = vmatpush1.xpose.msra.mxu0 0.0
    %476 = vmatprep.subr.mxu0 0.0
    %477 = vmatpush1.xpose.msra.mxu0 0.0
    %478 = vmatprep.subr.mxu0 0.0
    %479 = vmatpush1.xpose.msra.mxu0 0.0
    %480 = vmatprep.subr.mxu0 0.0
    %481 = vmatpush1.xpose.msra.mxu0 0.0
    %482 = vmatprep.subr.mxu0 0.0
    %483 = vmatpush1.xpose.msra.mxu0 0.0
    %484 = vmatprep.subr.mxu0 0.0
    %485 = vmatpush1.xpose.msra.mxu0 0.0
    %486 = vmatprep.subr.mxu0 0.0
    %487 = vmatpush1.xpose.msra.mxu0 0.0
    %488 = vmatprep.subr.mxu0 0.0
    %489 = vmatpush1.xpose.msra.mxu0 0.0
    %490 = vmatprep.subr.mxu0 0.0
    %491 = vmatpush1.xpose.msra.mxu0 0.0
    %492 = vmatprep.subr.mxu0 0.0
    %493 = vmatpush1.xpose.msra.mxu0 0.0
    %494 = vmatprep.subr.mxu0 0.0
    %495 = vmatpush1.xpose.msra.mxu0 0.0
    %496 = vmatprep.subr.mxu0 0.0
    %497 = vmatpush1.xpose.msra.mxu0 0.0
    %498 = vmatprep.subr.mxu0 0.0
    %499 = vmatpush1.xpose.msra.mxu0 0.0
    %500 = vmatprep.subr.mxu0 0.0
    %501 = vmatpush1.xpose.msra.mxu0 0.0
    %502 = vmatprep.subr.mxu0 0.0
    %503 = vmatpush1.xpose.msra.mxu0 0.0
    %504 = vmatprep.subr.mxu0 0.0
    %505 = vmatpush1.xpose.msra.mxu0 0.0
    %506 = vmatprep.subr.mxu0 0.0
    %507 = vmatpush1.xpose.msra.mxu0 0.0
    %508 = vmatprep.subr.mxu0 0.0
    %509 = vmatpush1.xpose.msra.mxu0 0.0
    %510 = vmatprep.subr.mxu0 0.0
    %511 = vmatpush1.xpose.msra.mxu0 0.0
    %512 = vmatprep.subr.mxu0 0.0
    %513 = vmatpush1.xpose.msra.mxu0 0.0
    %514 = vmatprep.subr.mxu0 0.0
    %515 = vmatpush1.xpose.msra.mxu0 0.0
    %516 = vmatprep.subr.mxu0 0.0
    %517 = vmatpush1.xpose.msra.mxu0 0.0
    %518 = vmatprep.mubr.f32.mxu0 0.0
    %519 = vmatmul.mubr.f32.gmra.mrb[0].mxu0 %v449
    %v520 = vpop.f32.mrb[0].mxu0
    %v521 = vadd.f32 0.0, %v520
    %v522 = vpop.f32.mrb[0].mxu0
    %523 = vdwg.mxu0
    %vm524 = vcmask 64512
    %v525 = vsel %vm524, %v445, -inf
    %526 = vmax.xlane.f32.xlu0 %v525
    %v527 = vpop.xlane.xlu0 %526
    %v528 = vsel %vm524, %v521, -inf
    %529 = vmax.xlane.f32.xlu0 %v528
    %v530 = vpop.xlane.xlu0 %529
    %v531 = vsub.f32 %v445, %v527
    %v532 = vsub.f32 %v521, %v530
    %v533 = vmul.f32 %v531, 1.442695
    %v534 = vpow.pop %v533
    %v535 = vmul.f32 %v532, 1.442695
    %v536 = vpow.pop %v535
    %v537 = vsel %vm524, %v534, 0.0
    %538 = vadd.xlane.f32.xlu0 %v537
    %v539 = vpop.xlane.xlu0 %538
    %v540 = vsel %vm524, %v536, 0.0
    %541 = vadd.xlane.f32.xlu0 %v540
    %v542 = vpop.xlane.xlu0 %541
    %v543 = vrcp.pop %v539
    %v544 = vrcp.pop %v542
    %v545 = vmul.f32 %v534, %v543
    %v546 = vmul.f32 %v536, %v544
    %v548 = vsel %vm524, %v545, 0
    %550 = vmatprep.subr.mxu0 0.0
    %551 = vmatpush1.msra.mxu0 %v364
    %552 = vmatprep.subr.mxu0 0.0
    %553 = vmatpush1.msra.mxu0 0.0
    %554 = vmatprep.subr.mxu0 0.0
    %555 = vmatpush1.msra.mxu0 0.0
    %556 = vmatprep.subr.mxu0 0.0
    %557 = vmatpush1.msra.mxu0 0.0
    %558 = vmatprep.subr.mxu0 0.0
    %559 = vmatpush1.msra.mxu0 0.0
    %560 = vmatprep.subr.mxu0 0.0
    %561 = vmatpush1.msra.mxu0 0.0
    %562 = vmatprep.subr.mxu0 0.0
    %563 = vmatpush1.msra.mxu0 0.0
    %564 = vmatprep.subr.mxu0 0.0
    %565 = vmatpush1.msra.mxu0 0.0
    %566 = vmatprep.subr.mxu0 0.0
    %567 = vmatpush1.msra.mxu0 0.0
    %568 = vmatprep.subr.mxu0 0.0
    %569 = vmatpush1.msra.mxu0 0.0
    %570 = vmatprep.subr.mxu0 0.0
    %571 = vmatpush1.msra.mxu0 0.0
    %572 = vmatprep.subr.mxu0 0.0
    %573 = vmatpush1.msra.mxu0 0.0
    %574 = vmatprep.subr.mxu0 0.0
    %575 = vmatpush1.msra.mxu0 0.0
    %576 = vmatprep.subr.mxu0 0.0
    %577 = vmatpush1.msra.mxu0 0.0
    %578 = vmatprep.subr.mxu0 0.0
    %579 = vmatpush1.msra.mxu0 0.0
    %580 = vmatprep.subr.mxu0 0.0
    %581 = vmatpush1.msra.mxu0 0.0
    %582 = vmatprep.subr.mxu0 0.0
    %583 = vmatpush1.msra.mxu0 0.0
    %584 = vmatprep.subr.mxu0 0.0
    %585 = vmatpush1.msra.mxu0 0.0
    %586 = vmatprep.subr.mxu0 0.0
    %587 = vmatpush1.msra.mxu0 0.0
    %588 = vmatprep.subr.mxu0 0.0
    %589 = vmatpush1.msra.mxu0 0.0
    %590 = vmatprep.subr.mxu0 0.0
    %591 = vmatpush1.msra.mxu0 0.0
    %592 = vmatprep.subr.mxu0 0.0
    %593 = vmatpush1.msra.mxu0 0.0
    %594 = vmatprep.subr.mxu0 0.0
    %595 = vmatpush1.msra.mxu0 0.0
    %596 = vmatprep.subr.mxu0 0.0
    %597 = vmatpush1.msra.mxu0 0.0
    %598 = vmatprep.subr.mxu0 0.0
    %599 = vmatpush1.msra.mxu0 0.0
    %600 = vmatprep.subr.mxu0 0.0
    %601 = vmatpush1.msra.mxu0 0.0
    %602 = vmatprep.subr.mxu0 0.0
    %603 = vmatpush1.msra.mxu0 0.0
    %604 = vmatprep.subr.mxu0 0.0
    %605 = vmatpush1.msra.mxu0 0.0
    %606 = vmatprep.subr.mxu0 0.0
    %607 = vmatpush1.msra.mxu0 0.0
    %608 = vmatprep.subr.mxu0 0.0
    %609 = vmatpush1.msra.mxu0 0.0
    %610 = vmatprep.subr.mxu0 0.0
    %611 = vmatpush1.msra.mxu0 0.0
    %612 = vmatprep.subr.mxu0 0.0
    %613 = vmatpush1.msra.mxu0 0.0
    %614 = vmatprep.mubr.f32.mxu0 0.0
    %615 = vmatmul.mubr.f32.gmra.mrb[0].mxu0 %v548
    %v616 = vpop.f32.mrb[0].mxu0
    %v617 = vadd.f32 0.0, %v616
    %v618 = vpop.f32.mrb[0].mxu0
    %619 = vdwg.mxu0
    %v621 = vsel %vm524, %v546, 0
    %623 = vmatprep.subr.mxu0 0.0
    %624 = vmatpush1.msra.mxu0 %v369
    %625 = vmatprep.subr.mxu0 0.0
    %626 = vmatpush1.msra.mxu0 0.0
    %627 = vmatprep.subr.mxu0 0.0
    %628 = vmatpush1.msra.mxu0 0.0
    %629 = vmatprep.subr.mxu0 0.0
    %630 = vmatpush1.msra.mxu0 0.0
    %631 = vmatprep.subr.mxu0 0.0
    %632 = vmatpush1.msra.mxu0 0.0
    %633 = vmatprep.subr.mxu0 0.0
    %634 = vmatpush1.msra.mxu0 0.0
    %635 = vmatprep.subr.mxu0 0.0
    %636 = vmatpush1.msra.mxu0 0.0
    %637 = vmatprep.subr.mxu0 0.0
    %638 = vmatpush1.msra.mxu0 0.0
    %639 = vmatprep.subr.mxu0 0.0
    %640 = vmatpush1.msra.mxu0 0.0
    %641 = vmatprep.subr.mxu0 0.0
    %642 = vmatpush1.msra.mxu0 0.0
    %643 = vmatprep.subr.mxu0 0.0
    %644 = vmatpush1.msra.mxu0 0.0
    %645 = vmatprep.subr.mxu0 0.0
    %646 = vmatpush1.msra.mxu0 0.0
    %647 = vmatprep.subr.mxu0 0.0
    %648 = vmatpush1.msra.mxu0 0.0
    %649 = vmatprep.subr.mxu0 0.0
    %650 = vmatpush1.msra.mxu0 0.0
    %651 = vmatprep.subr.mxu0 0.0
    %652 = vmatpush1.msra.mxu0 0.0
    %653 = vmatprep.subr.mxu0 0.0
    %654 = vmatpush1.msra.mxu0 0.0
    %655 = vmatprep.subr.mxu0 0.0
    %656 = vmatpush1.msra.mxu0 0.0
    %657 = vmatprep.subr.mxu0 0.0
    %658 = vmatpush1.msra.mxu0 0.0
    %659 = vmatprep.subr.mxu0 0.0
    %660 = vmatpush1.msra.mxu0 0.0
    %661 = vmatprep.subr.mxu0 0.0
    %662 = vmatpush1.msra.mxu0 0.0
    %663 = vmatprep.subr.mxu0 0.0
    %664 = vmatpush1.msra.mxu0 0.0
    %665 = vmatprep.subr.mxu0 0.0
    %666 = vmatpush1.msra.mxu0 0.0
    %667 = vmatprep.subr.mxu0 0.0
    %668 = vmatpush1.msra.mxu0 0.0
    %669 = vmatprep.subr.mxu0 0.0
    %670 = vmatpush1.msra.mxu0 0.0
    %671 = vmatprep.subr.mxu0 0.0
    %672 = vmatpush1.msra.mxu0 0.0
    %673 = vmatprep.subr.mxu0 0.0
    %674 = vmatpush1.msra.mxu0 0.0
    %675 = vmatprep.subr.mxu0 0.0
    %676 = vmatpush1.msra.mxu0 0.0
    %677 = vmatprep.subr.mxu0 0.0
    %678 = vmatpush1.msra.mxu0 0.0
    %679 = vmatprep.subr.mxu0 0.0
    %680 = vmatpush1.msra.mxu0 0.0
    %681 = vmatprep.subr.mxu0 0.0
    %682 = vmatpush1.msra.mxu0 0.0
    %683 = vmatprep.subr.mxu0 0.0
    %684 = vmatpush1.msra.mxu0 0.0
    %685 = vmatprep.subr.mxu0 0.0
    %686 = vmatpush1.msra.mxu0 0.0
    %687 = vmatprep.mubr.f32.mxu0 0.0
    %688 = vmatmul.mubr.f32.gmra.mrb[0].mxu0 %v621
    %v689 = vpop.f32.mrb[0].mxu0
    %v690 = vadd.f32 0.0, %v689
    %v691 = vpop.f32.mrb[0].mxu0
    %692 = vdwg.mxu0
    %s693 = scalar_lea.vmem [#allocation8], 96
    %v694 = vld [vmem:[%s693] sm:$0xff]
    %v695 = vld [vmem:[%s693 + $0x8] sm:$0xff]
    %v696 = vld [vmem:[%s693 + $0x10] sm:$0xff]
    %v697 = vld [vmem:[%s693 + $0x18] sm:$0xff]
    %v698 = vlaneseq
    %v699 = vshrl.u32 %v698, 7
    %v700 = vsub.s32 3, %v699
    %v701 = vrot.slane %v112, %v700
    %v703 = vsel %vm122, %v617, 0
    %v706 = vsel %vm122, %v690, 0
    %708 = vmatprep.subr.mxu0 0.0
    %709 = vmatpush1.msra.mxu0 %v694
    %710 = vmatprep.subr.mxu0 0.0
    %711 = vmatpush1.msra.mxu0 %v695
    %712 = vmatprep.subr.mxu0 0.0
    %713 = vmatpush1.msra.mxu0 %v696
    %714 = vmatprep.subr.mxu0 0.0
    %715 = vmatpush1.msra.mxu0 %v697
    %716 = vmatprep.subr.mxu0 0.0
    %717 = vmatpush1.msra.mxu0 0.0
    %718 = vmatprep.subr.mxu0 0.0
    %719 = vmatpush1.msra.mxu0 0.0
    %720 = vmatprep.subr.mxu0 0.0
    %721 = vmatpush1.msra.mxu0 0.0
    %722 = vmatprep.subr.mxu0 0.0
    %723 = vmatpush1.msra.mxu0 0.0
    %724 = vmatprep.subr.mxu0 0.0
    %725 = vmatpush1.msra.mxu0 0.0
    %726 = vmatprep.subr.mxu0 0.0
    %727 = vmatpush1.msra.mxu0 0.0
    %728 = vmatprep.subr.mxu0 0.0
    %729 = vmatpush1.msra.mxu0 0.0
    %730 = vmatprep.subr.mxu0 0.0
    %731 = vmatpush1.msra.mxu0 0.0
    %732 = vmatprep.subr.mxu0 0.0
    %733 = vmatpush1.msra.mxu0 0.0
    %734 = vmatprep.subr.mxu0 0.0
    %735 = vmatpush1.msra.mxu0 0.0
    %736 = vmatprep.subr.mxu0 0.0
    %737 = vmatpush1.msra.mxu0 0.0
    %738 = vmatprep.subr.mxu0 0.0
    %739 = vmatpush1.msra.mxu0 0.0
    %740 = vmatprep.subr.mxu0 0.0
    %741 = vmatpush1.msra.mxu0 0.0
    %742 = vmatprep.subr.mxu0 0.0
    %743 = vmatpush1.msra.mxu0 0.0
    %744 = vmatprep.subr.mxu0 0.0
    %745 = vmatpush1.msra.mxu0 0.0
    %746 = vmatprep.subr.mxu0 0.0
    %747 = vmatpush1.msra.mxu0 0.0
    %748 = vmatprep.subr.mxu0 0.0
    %749 = vmatpush1.msra.mxu0 0.0
    %750 = vmatprep.subr.mxu0 0.0
    %751 = vmatpush1.msra.mxu0 0.0
    %752 = vmatprep.subr.mxu0 0.0
    %753 = vmatpush1.msra.mxu0 0.0
    %754 = vmatprep.subr.mxu0 0.0
    %755 = vmatpush1.msra.mxu0 0.0
    %756 = vmatprep.subr.mxu0 0.0
    %757 = vmatpush1.msra.mxu0 0.0
    %758 = vmatprep.subr.mxu0 0.0
    %759 = vmatpush1.msra.mxu0 0.0
    %760 = vmatprep.subr.mxu0 0.0
    %761 = vmatpush1.msra.mxu0 0.0
    %762 = vmatprep.subr.mxu0 0.0
    %763 = vmatpush1.msra.mxu0 0.0
    %764 = vmatprep.subr.mxu0 0.0
    %765 = vmatpush1.msra.mxu0 0.0
    %766 = vmatprep.subr.mxu0 0.0
    %767 = vmatpush1.msra.mxu0 0.0
    %768 = vmatprep.subr.mxu0 0.0
    %769 = vmatpush1.msra.mxu0 0.0
    %770 = vmatprep.subr.mxu0 0.0
    %771 = vmatpush1.msra.mxu0 0.0
    %772 = vmatprep.mubr.f32.mxu0 0.0
    %773 = vmatmul.mubr.f32.gmra.mrb[0].mxu0 %v703
    %v774 = vpop.f32.mrb[0].mxu0
    %v775 = vadd.f32 %v701, %v774
    %v776 = vpop.f32.mrb[0].mxu0
    %777 = vmatprep.mubr.f32.mxu0 0.0
    %778 = vmatmul.mubr.f32.gmra.mrb[0].mxu0 %v706
    %v779 = vpop.f32.mrb[0].mxu0
    %v780 = vadd.f32 %v701, %v779
    %v781 = vpop.f32.mrb[0].mxu0
    %782 = vdwg.mxu0
    %v783 = vadd.f32 %v110, %v775
    %v784 = vadd.f32 %v111, %v780
    %v785 = vsel %vm122, %v783, 0.0
    %786 = vadd.xlane.f32.xlu0 %v785
    %v787 = vpop.xlane.xlu0 %786
    %v788 = vsel %vm122, %v784, 0.0
    %789 = vadd.xlane.f32.xlu0 %v788
    %v790 = vpop.xlane.xlu0 %789
    %v791 = vrcp.pop 32.0
    %v792 = vmul.f32 %v787, %v791
    %v793 = vmul.f32 %v790, %v791
    %v794 = vsub.f32 %v783, %v792
    %v795 = vsub.f32 %v784, %v793
    %v796 = vmul.f32 %v794, %v794
    %v797 = vmul.f32 %v795, %v795
    %v798 = vsel %vm122, %v796, 0.0
    %799 = vadd.xlane.f32.xlu0 %v798
    %v800 = vpop.xlane.xlu0 %799
    %v801 = vsel %vm122, %v797, 0.0
    %802 = vadd.xlane.f32.xlu0 %v801
    %v803 = vpop.xlane.xlu0 %802
    %v804 = vmul.f32 %v800, %v791
    %v805 = vmul.f32 %v803, %v791
    %v806 = vadd.f32 %v804, 1e-12
    %v807 = vadd.f32 %v805, 1e-12
    %v808 = vrsqrt.pop %v806
    %v809 = vrsqrt.pop %v807
    %v810 = vmul.f32 %v794, %v808
    %v811 = vmul.f32 %v795, %v809
    %v812 = vlaneseq
    %v813 = vshrl.u32 %v812, 7
    %v814 = vsub.s32 4, %v813
    %v815 = vrot.slane %v112, %v814
    %v816 = vmul.f32 %v810, %v815
    %v817 = vmul.f32 %v811, %v815
    %v818 = vlaneseq
    %v819 = vshrl.u32 %v818, 7
    %v820 = vsub.s32 5, %v819
    %v821 = vrot.slane %v112, %v820
    %v822 = vadd.f32 %v816, %v821
    %v823 = vadd.f32 %v817, %v821
    %v824 = vld [vmem:[#allocation11] sm:$0xff]
    %v825 = vld [vmem:[#allocation11 + $0x8] sm:$0xff]
    %v826 = vld [vmem:[#allocation11 + $0x10] sm:$0xff]
    %v827 = vld [vmem:[#allocation11 + $0x18] sm:$0xff]
    %v828 = vld [vmem:[%s6] sm:$0x1]
    %v830 = vlaneseq
    %v831 = vshrl.u32 %v830, 7
    %v832 = vsub.s32 0, %v831
    %v833 = vrot.slane %v828, %v832
    %v836 = vsel %vm122, %v822, 0
    %v839 = vsel %vm122, %v823, 0
    %841 = vmatprep.subr.mxu0 0.0
    %842 = vmatpush1.msra.mxu0 %v824
    %843 = vmatprep.subr.mxu0 0.0
    %844 = vmatpush1.msra.mxu0 %v825
    %845 = vmatprep.subr.mxu0 0.0
    %846 = vmatpush1.msra.mxu0 %v826
    %847 = vmatprep.subr.mxu0 0.0
    %848 = vmatpush1.msra.mxu0 %v827
    %849 = vmatprep.subr.mxu0 0.0
    %850 = vmatpush1.msra.mxu0 0.0
    %851 = vmatprep.subr.mxu0 0.0
    %852 = vmatpush1.msra.mxu0 0.0
    %853 = vmatprep.subr.mxu0 0.0
    %854 = vmatpush1.msra.mxu0 0.0
    %855 = vmatprep.subr.mxu0 0.0
    %856 = vmatpush1.msra.mxu0 0.0
    %857 = vmatprep.subr.mxu0 0.0
    %858 = vmatpush1.msra.mxu0 0.0
    %859 = vmatprep.subr.mxu0 0.0
    %860 = vmatpush1.msra.mxu0 0.0
    %861 = vmatprep.subr.mxu0 0.0
    %862 = vmatpush1.msra.mxu0 0.0
    %863 = vmatprep.subr.mxu0 0.0
    %864 = vmatpush1.msra.mxu0 0.0
    %865 = vmatprep.subr.mxu0 0.0
    %866 = vmatpush1.msra.mxu0 0.0
    %867 = vmatprep.subr.mxu0 0.0
    %868 = vmatpush1.msra.mxu0 0.0
    %869 = vmatprep.subr.mxu0 0.0
    %870 = vmatpush1.msra.mxu0 0.0
    %871 = vmatprep.subr.mxu0 0.0
    %872 = vmatpush1.msra.mxu0 0.0
    %873 = vmatprep.subr.mxu0 0.0
    %874 = vmatpush1.msra.mxu0 0.0
    %875 = vmatprep.subr.mxu0 0.0
    %876 = vmatpush1.msra.mxu0 0.0
    %877 = vmatprep.subr.mxu0 0.0
    %878 = vmatpush1.msra.mxu0 0.0
    %879 = vmatprep.subr.mxu0 0.0
    %880 = vmatpush1.msra.mxu0 0.0
    %881 = vmatprep.subr.mxu0 0.0
    %882 = vmatpush1.msra.mxu0 0.0
    %883 = vmatprep.subr.mxu0 0.0
    %884 = vmatpush1.msra.mxu0 0.0
    %885 = vmatprep.subr.mxu0 0.0
    %886 = vmatpush1.msra.mxu0 0.0
    %887 = vmatprep.subr.mxu0 0.0
    %888 = vmatpush1.msra.mxu0 0.0
    %889 = vmatprep.subr.mxu0 0.0
    %890 = vmatpush1.msra.mxu0 0.0
    %891 = vmatprep.subr.mxu0 0.0
    %892 = vmatpush1.msra.mxu0 0.0
    %893 = vmatprep.subr.mxu0 0.0
    %894 = vmatpush1.msra.mxu0 0.0
    %895 = vmatprep.subr.mxu0 0.0
    %896 = vmatpush1.msra.mxu0 0.0
    %897 = vmatprep.subr.mxu0 0.0
    %898 = vmatpush1.msra.mxu0 0.0
    %899 = vmatprep.subr.mxu0 0.0
    %900 = vmatpush1.msra.mxu0 0.0
    %901 = vmatprep.subr.mxu0 0.0
    %902 = vmatpush1.msra.mxu0 0.0
    %903 = vmatprep.subr.mxu0 0.0
    %904 = vmatpush1.msra.mxu0 0.0
    %905 = vmatprep.mubr.f32.mxu0 0.0
    %906 = vmatmul.mubr.f32.gmra.mrb[0].mxu0 %v836
    %v907 = vpop.f32.mrb[0].mxu0
    %v908 = vadd.f32 %v833, %v907
    %v909 = vpop.f32.mrb[0].mxu0
    %910 = vmatprep.mubr.f32.mxu0 0.0
    %911 = vmatmul.mubr.f32.gmra.mrb[0].mxu0 %v839
    %v912 = vpop.f32.mrb[0].mxu0
    %v913 = vadd.f32 %v833, %v912
    %v914 = vpop.f32.mrb[0].mxu0
    %915 = vdwg.mxu0
    %v916 = vmul.f32 %v908, %v908
    %v917 = vmul.f32 %v913, %v913
    %v918 = vmul.f32 %v908, %v916
    %v919 = vmul.f32 %v913, %v917
    %v920 = vmul.f32 %v918, 0.044715
    %v921 = vmul.f32 %v919, 0.044715
    %v922 = vadd.f32 %v908, %v920
    %v923 = vadd.f32 %v913, %v921
    %v924 = vmul.f32 %v922, 0.7978846
    %v925 = vmul.f32 %v923, 0.7978846
    %v926 = vtanh.pop %v924
    %v927 = vtanh.pop %v925
    %v928 = vadd.f32 %v926, 1.0
    %v929 = vadd.f32 %v927, 1.0
    %v930 = vmul.f32 %v928, 0.5
    %v931 = vmul.f32 %v929, 0.5
    %v932 = vmul.f32 %v908, %v930
    %v933 = vmul.f32 %v913, %v931
    %v934 = vld [vmem:[%s7] sm:$0xff]
    %v935 = vld [vmem:[%s7 + $0x8] sm:$0xff]
    %v936 = vld [vmem:[%s7 + $0x10] sm:$0xff]
    %v937 = vld [vmem:[%s7 + $0x18] sm:$0xff]
    %v938 = vld [vmem:[%s7 + $0x20] sm:$0xff]
    %v939 = vld [vmem:[%s7 + $0x28] sm:$0xff]
    %v940 = vld [vmem:[%s7 + $0x30] sm:$0xff]
    %v941 = vld [vmem:[%s7 + $0x38] sm:$0xff]
    %v942 = vlaneseq
    %v943 = vshrl.u32 %v942, 7
    %v944 = vsub.s32 6, %v943
    %v945 = vrot.slane %v112, %v944
    %vm946 = vcmask 523264
    %v948 = vsel %vm946, %v932, 0
    %v951 = vsel %vm946, %v933, 0
    %953 = vmatprep.subr.mxu0 0.0
    %954 = vmatpush1.msra.mxu0 %v934
    %955 = vmatprep.subr.mxu0 0.0
    %956 = vmatpush1.msra.mxu0 %v935
    %957 = vmatprep.subr.mxu0 0.0
    %958 = vmatpush1.msra.mxu0 %v936
    %959 = vmatprep.subr.mxu0 0.0
    %960 = vmatpush1.msra.mxu0 %v937
    %961 = vmatprep.subr.mxu0 0.0
    %962 = vmatpush1.msra.mxu0 %v938
    %963 = vmatprep.subr.mxu0 0.0
    %964 = vmatpush1.msra.mxu0 %v939
    %965 = vmatprep.subr.mxu0 0.0
    %966 = vmatpush1.msra.mxu0 %v940
    %967 = vmatprep.subr.mxu0 0.0
    %968 = vmatpush1.msra.mxu0 %v941
    %969 = vmatprep.subr.mxu0 0.0
    %970 = vmatpush1.msra.mxu0 0.0
    %971 = vmatprep.subr.mxu0 0.0
    %972 = vmatpush1.msra.mxu0 0.0
    %973 = vmatprep.subr.mxu0 0.0
    %974 = vmatpush1.msra.mxu0 0.0
    %975 = vmatprep.subr.mxu0 0.0
    %976 = vmatpush1.msra.mxu0 0.0
    %977 = vmatprep.subr.mxu0 0.0
    %978 = vmatpush1.msra.mxu0 0.0
    %979 = vmatprep.subr.mxu0 0.0
    %980 = vmatpush1.msra.mxu0 0.0
    %981 = vmatprep.subr.mxu0 0.0
    %982 = vmatpush1.msra.mxu0 0.0
    %983 = vmatprep.subr.mxu0 0.0
    %984 = vmatpush1.msra.mxu0 0.0
    %985 = vmatprep.subr.mxu0 0.0
    %986 = vmatpush1.msra.mxu0 0.0
    %987 = vmatprep.subr.mxu0 0.0
    %988 = vmatpush1.msra.mxu0 0.0
    %989 = vmatprep.subr.mxu0 0.0
    %990 = vmatpush1.msra.mxu0 0.0
    %991 = vmatprep.subr.mxu0 0.0
    %992 = vmatpush1.msra.mxu0 0.0
    %993 = vmatprep.subr.mxu0 0.0
    %994 = vmatpush1.msra.mxu0 0.0
    %995 = vmatprep.subr.mxu0 0.0
    %996 = vmatpush1.msra.mxu0 0.0
    %997 = vmatprep.subr.mxu0 0.0
    %998 = vmatpush1.msra.mxu0 0.0
    %999 = vmatprep.subr.mxu0 0.0
    %1000 = vmatpush1.msra.mxu0 0.0
    %1001 = vmatprep.subr.mxu0 0.0
    %1002 = vmatpush1.msra.mxu0 0.0
    %1003 = vmatprep.subr.mxu0 0.0
    %1004 = vmatpush1.msra.mxu0 0.0
    %1005 = vmatprep.subr.mxu0 0.0
    %1006 = vmatpush1.msra.mxu0 0.0
    %1007 = vmatprep.subr.mxu0 0.0
    %1008 = vmatpush1.msra.mxu0 0.0
    %1009 = vmatprep.subr.mxu0 0.0
    %1010 = vmatpush1.msra.mxu0 0.0
    %1011 = vmatprep.subr.mxu0 0.0
    %1012 = vmatpush1.msra.mxu0 0.0
    %1013 = vmatprep.subr.mxu0 0.0
    %1014 = vmatpush1.msra.mxu0 0.0
    %1015 = vmatprep.subr.mxu0 0.0
    %1016 = vmatpush1.msra.mxu0 0.0
    %1017 = vmatprep.mubr.f32.mxu0 0.0
    %1018 = vmatmul.mubr.f32.gmra.mrb[0].mxu0 %v948
    %v1019 = vpop.f32.mrb[0].mxu0
    %v1020 = vadd.f32 %v945, %v1019
    %v1021 = vpop.f32.mrb[0].mxu0
    %1022 = vmatprep.mubr.f32.mxu0 0.0
    %1023 = vmatmul.mubr.f32.gmra.mrb[0].mxu0 %v951
    %v1024 = vpop.f32.mrb[0].mxu0
    %v1025 = vadd.f32 %v945, %v1024
    %v1026 = vpop.f32.mrb[0].mxu0
    %1027 = vdwg.mxu0
    %v1028 = vadd.f32 %v822, %v1020
    %v1029 = vadd.f32 %v823, %v1025
    %v1030 = vsel %vm122, %v1028, 0.0
    %1031 = vadd.xlane.f32.xlu0 %v1030
    %v1032 = vpop.xlane.xlu0 %1031
    %v1033 = vsel %vm122, %v1029, 0.0
    %1034 = vadd.xlane.f32.xlu0 %v1033
    %v1035 = vpop.xlane.xlu0 %1034
    %v1036 = vmul.f32 %v1032, %v791
    %v1037 = vmul.f32 %v1035, %v791
    %v1038 = vsub.f32 %v1028, %v1036
    %v1039 = vsub.f32 %v1029, %v1037
    %v1040 = vmul.f32 %v1038, %v1038
    %v1041 = vmul.f32 %v1039, %v1039
    %v1042 = vsel %vm122, %v1040, 0.0
    %1043 = vadd.xlane.f32.xlu0 %v1042
    %v1044 = vpop.xlane.xlu0 %1043
    %v1045 = vsel %vm122, %v1041, 0.0
    %1046 = vadd.xlane.f32.xlu0 %v1045
    %v1047 = vpop.xlane.xlu0 %1046
    %v1048 = vmul.f32 %v1044, %v791
    %v1049 = vmul.f32 %v1047, %v791
    %v1050 = vadd.f32 %v1048, 1e-12
    %v1051 = vadd.f32 %v1049, 1e-12
    %v1052 = vrsqrt.pop %v1050
    %v1053 = vrsqrt.pop %v1051
    %v1054 = vmul.f32 %v1038, %v1052
    %v1055 = vmul.f32 %v1039, %v1053
    %v1056 = vlaneseq
    %v1057 = vshrl.u32 %v1056, 7
    %v1058 = vsub.s32 7, %v1057
    %v1059 = vrot.slane %v112, %v1058
    %v1060 = vmul.f32 %v1054, %v1059
    %v1061 = vmul.f32 %v1055, %v1059
    %v1062 = vlaneseq
    %v1063 = vshrl.u32 %v1062, 7
    %v1064 = vsub.s32 0, %v1063
    %v1065 = vrot.slane %v113, %v1064
    %v1066 = vadd.f32 %v1060, %v1065
    %v1067 = vadd.f32 %v1061, %v1065
    %v1068 = vld [vmem:[#allocation13] sm:$0xff]
    %v1069 = vld [vmem:[#allocation13 + $0x8] sm:$0xff]
    %v1070 = vld [vmem:[#allocation13 + $0x10] sm:$0xff]
    %v1071 = vld [vmem:[#allocation13 + $0x18] sm:$0xff]
    %v1072 = vld [vmem:[%s9] sm:$0x1]
    %v1074 = vlaneseq
    %v1075 = vshrl.u32 %v1074, 7
    %v1076 = vsub.s32 0, %v1075
    %v1077 = vrot.slane %v1072, %v1076
    %v1080 = vsel %vm122, %v1066, 0
    %v1083 = vsel %vm122, %v1067, 0
    %1085 = vmatprep.subr.mxu0 0.0
    %1086 = vmatpush1.msra.mxu0 %v1068
    %1087 = vmatprep.subr.mxu0 0.0
    %1088 = vmatpush1.msra.mxu0 %v1069
    %1089 = vmatprep.subr.mxu0 0.0
    %1090 = vmatpush1.msra.mxu0 %v1070
    %1091 = vmatprep.subr.mxu0 0.0
    %1092 = vmatpush1.msra.mxu0 %v1071
    %1093 = vmatprep.subr.mxu0 0.0
    %1094 = vmatpush1.msra.mxu0 0.0
    %1095 = vmatprep.subr.mxu0 0.0
    %1096 = vmatpush1.msra.mxu0 0.0
    %1097 = vmatprep.subr.mxu0 0.0
    %1098 = vmatpush1.msra.mxu0 0.0
    %1099 = vmatprep.subr.mxu0 0.0
    %1100 = vmatpush1.msra.mxu0 0.0
    %1101 = vmatprep.subr.mxu0 0.0
    %1102 = vmatpush1.msra.mxu0 0.0
    %1103 = vmatprep.subr.mxu0 0.0
    %1104 = vmatpush1.msra.mxu0 0.0
    %1105 = vmatprep.subr.mxu0 0.0
    %1106 = vmatpush1.msra.mxu0 0.0
    %1107 = vmatprep.subr.mxu0 0.0
    %1108 = vmatpush1.msra.mxu0 0.0
    %1109 = vmatprep.subr.mxu0 0.0
    %1110 = vmatpush1.msra.mxu0 0.0
    %1111 = vmatprep.subr.mxu0 0.0
    %1112 = vmatpush1.msra.mxu0 0.0
    %1113 = vmatprep.subr.mxu0 0.0
    %1114 = vmatpush1.msra.mxu0 0.0
    %1115 = vmatprep.subr.mxu0 0.0
    %1116 = vmatpush1.msra.mxu0 0.0
    %1117 = vmatprep.subr.mxu0 0.0
    %1118 = vmatpush1.msra.mxu0 0.0
    %1119 = vmatprep.subr.mxu0 0.0
    %1120 = vmatpush1.msra.mxu0 0.0
    %1121 = vmatprep.subr.mxu0 0.0
    %1122 = vmatpush1.msra.mxu0 0.0
    %1123 = vmatprep.subr.mxu0 0.0
    %1124 = vmatpush1.msra.mxu0 0.0
    %1125 = vmatprep.subr.mxu0 0.0
    %1126 = vmatpush1.msra.mxu0 0.0
    %1127 = vmatprep.subr.mxu0 0.0
    %1128 = vmatpush1.msra.mxu0 0.0
    %1129 = vmatprep.subr.mxu0 0.0
    %1130 = vmatpush1.msra.mxu0 0.0
    %1131 = vmatprep.subr.mxu0 0.0
    %1132 = vmatpush1.msra.mxu0 0.0
    %1133 = vmatprep.subr.mxu0 0.0
    %1134 = vmatpush1.msra.mxu0 0.0
    %1135 = vmatprep.subr.mxu0 0.0
    %1136 = vmatpush1.msra.mxu0 0.0
    %1137 = vmatprep.subr.mxu0 0.0
    %1138 = vmatpush1.msra.mxu0 0.0
    %1139 = vmatprep.subr.mxu0 0.0
    %1140 = vmatpush1.msra.mxu0 0.0
    %1141 = vmatprep.subr.mxu0 0.0
    %1142 = vmatpush1.msra.mxu0 0.0
    %1143 = vmatprep.subr.mxu0 0.0
    %1144 = vmatpush1.msra.mxu0 0.0
    %1145 = vmatprep.subr.mxu0 0.0
    %1146 = vmatpush1.msra.mxu0 0.0
    %1147 = vmatprep.subr.mxu0 0.0
    %1148 = vmatpush1.msra.mxu0 0.0
    %1149 = vmatprep.mubr.f32.mxu0 0.0
    %1150 = vmatmul.mubr.f32.gmra.mrb[0].mxu0 %v1080
    %v1151 = vpop.f32.mrb[0].mxu0
    %v1152 = vadd.f32 %v1077, %v1151
    %v1153 = vpop.f32.mrb[0].mxu0
    %1154 = vmatprep.mubr.f32.mxu0 0.0
    %1155 = vmatmul.mubr.f32.gmra.mrb[0].mxu0 %v1083
    %v1156 = vpop.f32.mrb[0].mxu0
    %v1157 = vadd.f32 %v1077, %v1156
    %v1158 = vpop.f32.mrb[0].mxu0
    %1159 = vdwg.mxu0
    %1160 = vst [vmem:[#allocation2] sm:$0xff] %v1152
    %1161 = vst [vmem:[#allocation2 + $0x8] sm:$0xff] %v1157
    %s1162 = sld [smem:[#allocation4]]
    %v1163 = vld [vmem:[%s1] sm:$0x3]
    %v1164 = vlaneseq
    %v1165 = vand.u32 %v1164, 127
    %vm1166 = vcmp.eq.s32.totalorder %v1165, 7
    %v1167 = vsel %vm1166, 0.0, -10000.0
    %1168 = vst [vmem:[#allocation3] sm:$0x3] %v1167
    %v1169 = vld [vmem:[%s10] sm:$0xff]
    %v1170 = vld [vmem:[%s10 + $0x8] sm:$0xff]
    %v1171 = vld [vmem:[%s10 + $0x10] sm:$0xff]
    %v1172 = vld [vmem:[%s10 + $0x18] sm:$0xff]
    %v1173 = vld [vmem:[%s10 + $0x20] sm:$0xff]
    %v1174 = vld [vmem:[%s10 + $0x28] sm:$0xff]
    %v1175 = vld [vmem:[%s10 + $0x30] sm:$0xff]
    %v1176 = vld [vmem:[%s10 + $0x38] sm:$0xff]
    %v1177 = vld [vmem:[%s10 + $0x40] sm:$0xff]
    %v1178 = vld [vmem:[%s10 + $0x48] sm:$0xff]
    %v1179 = vld [vmem:[%s10 + $0x50] sm:$0xff]
    %v1180 = vld [vmem:[%s10 + $0x58] sm:$0xff]
    %v1181 = vld [vmem:[%s10 + $0x60] sm:$0xff]
    %v1182 = vld [vmem:[%s10 + $0x68] sm:$0xff]
    %v1183 = vld [vmem:[%s10 + $0x70] sm:$0xff]
    %v1184 = vld [vmem:[%s10 + $0x78] sm:$0xff]
    // While loop
    $region66: #{tpu_custom_call.1} parent=1 // loop_pre_header
      _
    $region67: #{tpu_custom_call.1} parent=1 // loop_header
      %s1186 = sphi 0, %s1188
      %p1187 = scmp.ge.s32.totalorder %s1186, %s1162
    $region68: #{tpu_custom_call.1} parent=1 // loop_header_branch
      %1190 = sbr.rel (%p1187) target = $region72
    $region69: #{tpu_custom_call.1} parent=1 // loop_body
      %v1191 = vld [vmem:[#allocation3] sm:$0x3]
      %v1194 = vunpack.c.l.s4 1966171168
      %v1195 = vunpack.c.0.s8 %v1194
      %v1196 = vlaneseq
      %v1197 = vshrl.u32 %v1196, 7
      %v1198 = vsub.s32 %v1195, %v1197
      %v1199 = vrot.slane %v1191, %v1198
      %v1200 = vcombine.high %v1199, %v1199
      %v1202 = vunpack.c.l.s4 1966171168
      %v1203 = vunpack.c.0.s8 %v1202
      %v1204 = vlaneseq
      %v1205 = vshrl.u32 %v1204, 7
      %v1206 = vsub.s32 %v1203, %v1205
      %v1207 = vrot.slane %v1199, %v1206
      %v1209 = vunpack.c.l.s4 1966171168
      %v1210 = vunpack.c.0.s8 %v1209
      %v1211 = vlaneseq
      %v1212 = vshrl.u32 %v1211, 7
      %v1213 = vsub.s32 %v1210, %v1212
      %v1214 = vrot.slane %v1200, %v1213
      %v1215 = vlaneseq
      %v1216 = vshrl.u32 %v1215, 7
      %v1217 = vsub.s32 0, %v1216
      %v1218 = vrot.slane %v1207, %v1217
      %v1219 = vlaneseq
      %v1220 = vshrl.u32 %v1219, 7
      %v1221 = vsub.s32 0, %v1220
      %v1222 = vrot.slane %v1214, %v1221
      %v1225 = vadd.f32 %v1218, %v1169
      %v1226 = vadd.f32 %v1218, %v1170
      %v1227 = vadd.f32 %v1218, %v1171
      %v1228 = vadd.f32 %v1218, %v1172
      %v1229 = vadd.f32 %v1218, %v1173
      %v1230 = vadd.f32 %v1218, %v1174
      %v1231 = vadd.f32 %v1218, %v1175
      %v1232 = vadd.f32 %v1218, %v1176
      %v1233 = vadd.f32 %v1218, %v1177
      %v1234 = vadd.f32 %v1218, %v1178
      %v1235 = vadd.f32 %v1218, %v1179
      %v1236 = vadd.f32 %v1218, %v1180
      %v1237 = vadd.f32 %v1218, %v1181
      %v1238 = vadd.f32 %v1218, %v1182
      %v1239 = vadd.f32 %v1218, %v1183
      %v1240 = vadd.f32 %v1218, %v1184
      %v1241 = vadd.f32 %v1222, %v1169
      %v1242 = vadd.f32 %v1222, %v1170
      %v1243 = vadd.f32 %v1222, %v1171
      %v1244 = vadd.f32 %v1222, %v1172
      %v1245 = vadd.f32 %v1222, %v1173
      %v1246 = vadd.f32 %v1222, %v1174
      %v1247 = vadd.f32 %v1222, %v1175
      %v1248 = vadd.f32 %v1222, %v1176
      %v1249 = vadd.f32 %v1222, %v1177
      %v1250 = vadd.f32 %v1222, %v1178
      %v1251 = vadd.f32 %v1222, %v1179
      %v1252 = vadd.f32 %v1222, %v1180
      %v1253 = vadd.f32 %v1222, %v1181
      %v1254 = vadd.f32 %v1222, %v1182
      %v1255 = vadd.f32 %v1222, %v1183
      %v1256 = vadd.f32 %v1222, %v1184
      %1257 = vmax.xlane.f32.xlu0 %v1225
      %v1258 = vpop.xlane.xlu0 %1257
      %1259 = vmax.xlane.f32.xlu0 %v1226
      %v1260 = vpop.xlane.xlu0 %1259
      %1261 = vmax.xlane.f32.xlu0 %v1227
      %v1262 = vpop.xlane.xlu0 %1261
      %1263 = vmax.xlane.f32.xlu0 %v1228
      %v1264 = vpop.xlane.xlu0 %1263
      %1265 = vmax.xlane.f32.xlu0 %v1229
      %v1266 = vpop.xlane.xlu0 %1265
      %1267 = vmax.xlane.f32.xlu0 %v1230
      %v1268 = vpop.xlane.xlu0 %1267
      %1269 = vmax.xlane.f32.xlu0 %v1231
      %v1270 = vpop.xlane.xlu0 %1269
      %1271 = vmax.xlane.f32.xlu0 %v1232
      %v1272 = vpop.xlane.xlu0 %1271
      %1273 = vmax.xlane.f32.xlu0 %v1233
      %v1274 = vpop.xlane.xlu0 %1273
      %1275 = vmax.xlane.f32.xlu0 %v1234
      %v1276 = vpop.xlane.xlu0 %1275
      %1277 = vmax.xlane.f32.xlu0 %v1235
      %v1278 = vpop.xlane.xlu0 %1277
      %1279 = vmax.xlane.f32.xlu0 %v1236
      %v1280 = vpop.xlane.xlu0 %1279
      %1281 = vmax.xlane.f32.xlu0 %v1237
      %v1282 = vpop.xlane.xlu0 %1281
      %1283 = vmax.xlane.f32.xlu0 %v1238
      %v1284 = vpop.xlane.xlu0 %1283
      %1285 = vmax.xlane.f32.xlu0 %v1239
      %v1286 = vpop.xlane.xlu0 %1285
      %1287 = vmax.xlane.f32.xlu0 %v1240
      %v1288 = vpop.xlane.xlu0 %1287
      %1289 = vmax.xlane.f32.xlu0 %v1241
      %v1290 = vpop.xlane.xlu0 %1289
      %1291 = vmax.xlane.f32.xlu0 %v1242
      %v1292 = vpop.xlane.xlu0 %1291
      %1293 = vmax.xlane.f32.xlu0 %v1243
      %v1294 = vpop.xlane.xlu0 %1293
      %1295 = vmax.xlane.f32.xlu0 %v1244
      %v1296 = vpop.xlane.xlu0 %1295
      %1297 = vmax.xlane.f32.xlu0 %v1245
      %v1298 = vpop.xlane.xlu0 %1297
      %1299 = vmax.xlane.f32.xlu0 %v1246
      %v1300 = vpop.xlane.xlu0 %1299
      %1301 = vmax.xlane.f32.xlu0 %v1247
      %v1302 = vpop.xlane.xlu0 %1301
      %1303 = vmax.xlane.f32.xlu0 %v1248
      %v1304 = vpop.xlane.xlu0 %1303
      %1305 = vmax.xlane.f32.xlu0 %v1249
      %v1306 = vpop.xlane.xlu0 %1305
      %1307 = vmax.xlane.f32.xlu0 %v1250
      %v1308 = vpop.xlane.xlu0 %1307
      %1309 = vmax.xlane.f32.xlu0 %v1251
      %v1310 = vpop.xlane.xlu0 %1309
      %1311 = vmax.xlane.f32.xlu0 %v1252
      %v1312 = vpop.xlane.xlu0 %1311
      %1313 = vmax.xlane.f32.xlu0 %v1253
      %v1314 = vpop.xlane.xlu0 %1313
      %1315 = vmax.xlane.f32.xlu0 %v1254
      %v1316 = vpop.xlane.xlu0 %1315
      %1317 = vmax.xlane.f32.xlu0 %v1255
      %v1318 = vpop.xlane.xlu0 %1317
      %1319 = vmax.xlane.f32.xlu0 %v1256
      %v1320 = vpop.xlane.xlu0 %1319
      %vm1321 = vcmp.eq.f32.partialorder %v1225, %v1258
      %vm1322 = vcmp.eq.f32.partialorder %v1226, %v1260
      %vm1323 = vcmp.eq.f32.partialorder %v1227, %v1262
      %vm1324 = vcmp.eq.f32.partialorder %v1228, %v1264
      %vm1325 = vcmp.eq.f32.partialorder %v1229, %v1266
      %vm1326 = vcmp.eq.f32.partialorder %v1230, %v1268
      %vm1327 = vcmp.eq.f32.partialorder %v1231, %v1270
      %vm1328 = vcmp.eq.f32.partialorder %v1232, %v1272
      %vm1329 = vcmp.eq.f32.partialorder %v1233, %v1274
      %vm1330 = vcmp.eq.f32.partialorder %v1234, %v1276
      %vm1331 = vcmp.eq.f32.partialorder %v1235, %v1278
      %vm1332 = vcmp.eq.f32.partialorder %v1236, %v1280
      %vm1333 = vcmp.eq.f32.partialorder %v1237, %v1282
      %vm1334 = vcmp.eq.f32.partialorder %v1238, %v1284
      %vm1335 = vcmp.eq.f32.partialorder %v1239, %v1286
      %vm1336 = vcmp.eq.f32.partialorder %v1240, %v1288
      %vm1337 = vcmp.eq.f32.partialorder %v1241, %v1290
      %vm1338 = vcmp.eq.f32.partialorder %v1242, %v1292
      %vm1339 = vcmp.eq.f32.partialorder %v1243, %v1294
      %vm1340 = vcmp.eq.f32.partialorder %v1244, %v1296
      %vm1341 = vcmp.eq.f32.partialorder %v1245, %v1298
      %vm1342 = vcmp.eq.f32.partialorder %v1246, %v1300
      %vm1343 = vcmp.eq.f32.partialorder %v1247, %v1302
      %vm1344 = vcmp.eq.f32.partialorder %v1248, %v1304
      %vm1345 = vcmp.eq.f32.partialorder %v1249, %v1306
      %vm1346 = vcmp.eq.f32.partialorder %v1250, %v1308
      %vm1347 = vcmp.eq.f32.partialorder %v1251, %v1310
      %vm1348 = vcmp.eq.f32.partialorder %v1252, %v1312
      %vm1349 = vcmp.eq.f32.partialorder %v1253, %v1314
      %vm1350 = vcmp.eq.f32.partialorder %v1254, %v1316
      %vm1351 = vcmp.eq.f32.partialorder %v1255, %v1318
      %vm1352 = vcmp.eq.f32.partialorder %v1256, %v1320
      %v1353 = vsel %vm1321, %v1165, 128
      %v1354 = vsel %vm1322, %v1165, 128
      %v1355 = vsel %vm1323, %v1165, 128
      %v1356 = vsel %vm1324, %v1165, 128
      %v1357 = vsel %vm1325, %v1165, 128
      %v1358 = vsel %vm1326, %v1165, 128
      %v1359 = vsel %vm1327, %v1165, 128
      %v1360 = vsel %vm1328, %v1165, 128
      %v1361 = vsel %vm1329, %v1165, 128
      %v1362 = vsel %vm1330, %v1165, 128
      %v1363 = vsel %vm1331, %v1165, 128
      %v1364 = vsel %vm1332, %v1165, 128
      %v1365 = vsel %vm1333, %v1165, 128
      %v1366 = vsel %vm1334, %v1165, 128
      %v1367 = vsel %vm1335, %v1165, 128
      %v1368 = vsel %vm1336, %v1165, 128
      %v1369 = vsel %vm1337, %v1165, 128
      %v1370 = vsel %vm1338, %v1165, 128
      %v1371 = vsel %vm1339, %v1165, 128
      %v1372 = vsel %vm1340, %v1165, 128
      %v1373 = vsel %vm1341, %v1165, 128
      %v1374 = vsel %vm1342, %v1165, 128
      %v1375 = vsel %vm1343, %v1165, 128
      %v1376 = vsel %vm1344, %v1165, 128
      %v1377 = vsel %vm1345, %v1165, 128
      %v1378 = vsel %vm1346, %v1165, 128
      %v1379 = vsel %vm1347, %v1165, 128
      %v1380 = vsel %vm1348, %v1165, 128
      %v1381 = vsel %vm1349, %v1165, 128
      %v1382 = vsel %vm1350, %v1165, 128
      %v1383 = vsel %vm1351, %v1165, 128
      %v1384 = vsel %vm1352, %v1165, 128
      %v1385 = vand.u32 %v1353, 65535
      %v1386 = vshra.s32 %v1353, 16
      %v1387 = vcvt.s32.f32 %v1385
      %v1388 = vcvt.s32.f32 %v1386
      %1389 = vmin.xlane.f32.xlu0 %v1388
      %v1390 = vpop.xlane.xlu0 %1389
      %vm1391 = vcmp.eq.f32.partialorder %v1388, %v1390
      %v1392 = vsel %vm1391, %v1387, inf
      %1393 = vmin.xlane.f32.xlu0 %v1392
      %v1394 = vpop.xlane.xlu0 %1393
      %v1395 = vcvt.f32.s32 %v1394
      %v1396 = vcvt.f32.s32 %v1390
      %v1397 = vshll.u32 %v1396, 16
      %v1398 = vadd.s32 %v1397, %v1395
      %v1399 = vand.u32 %v1354, 65535
      %v1400 = vshra.s32 %v1354, 16
      %v1401 = vcvt.s32.f32 %v1399
      %v1402 = vcvt.s32.f32 %v1400
      %1403 = vmin.xlane.f32.xlu0 %v1402
      %v1404 = vpop.xlane.xlu0 %1403
      %vm1405 = vcmp.eq.f32.partialorder %v1402, %v1404
      %v1406 = vsel %vm1405, %v1401, inf
      %1407 = vmin.xlane.f32.xlu0 %v1406
      %v1408 = vpop.xlane.xlu0 %1407
      %v1409 = vcvt.f32.s32 %v1408
      %v1410 = vcvt.f32.s32 %v1404
      %v1411 = vshll.u32 %v1410, 16
      %v1412 = vadd.s32 %v1411, %v1409
      %v1413 = vand.u32 %v1355, 65535
      %v1414 = vshra.s32 %v1355, 16
      %v1415 = vcvt.s32.f32 %v1413
      %v1416 = vcvt.s32.f32 %v1414
      %1417 = vmin.xlane.f32.xlu0 %v1416
      %v1418 = vpop.xlane.xlu0 %1417
      %vm1419 = vcmp.eq.f32.partialorder %v1416, %v1418
      %v1420 = vsel %vm1419, %v1415, inf
      %1421 = vmin.xlane.f32.xlu0 %v1420
      %v1422 = vpop.xlane.xlu0 %1421
      %v1423 = vcvt.f32.s32 %v1422
      %v1424 = vcvt.f32.s32 %v1418
      %v1425 = vshll.u32 %v1424, 16
      %v1426 = vadd.s32 %v1425, %v1423
      %v1427 = vand.u32 %v1356, 65535
      %v1428 = vshra.s32 %v1356, 16
      %v1429 = vcvt.s32.f32 %v1427
      %v1430 = vcvt.s32.f32 %v1428
      %1431 = vmin.xlane.f32.xlu0 %v1430
      %v1432 = vpop.xlane.xlu0 %1431
      %vm1433 = vcmp.eq.f32.partialorder %v1430, %v1432
      %v1434 = vsel %vm1433, %v1429, inf
      %1435 = vmin.xlane.f32.xlu0 %v1434
      %v1436 = vpop.xlane.xlu0 %1435
      %v1437 = vcvt.f32.s32 %v1436
      %v1438 = vcvt.f32.s32 %v1432
      %v1439 = vshll.u32 %v1438, 16
      %v1440 = vadd.s32 %v1439, %v1437
      %v1441 = vand.u32 %v1357, 65535
      %v1442 = vshra.s32 %v1357, 16
      %v1443 = vcvt.s32.f32 %v1441
      %v1444 = vcvt.s32.f32 %v1442
      %1445 = vmin.xlane.f32.xlu0 %v1444
      %v1446 = vpop.xlane.xlu0 %1445
      %vm1447 = vcmp.eq.f32.partialorder %v1444, %v1446
      %v1448 = vsel %vm1447, %v1443, inf
      %1449 = vmin.xlane.f32.xlu0 %v1448
      %v1450 = vpop.xlane.xlu0 %1449
      %v1451 = vcvt.f32.s32 %v1450
      %v1452 = vcvt.f32.s32 %v1446
      %v1453 = vshll.u32 %v1452, 16
      %v1454 = vadd.s32 %v1453, %v1451
      %v1455 = vand.u32 %v1358, 65535
      %v1456 = vshra.s32 %v1358, 16
      %v1457 = vcvt.s32.f32 %v1455
      %v1458 = vcvt.s32.f32 %v1456
      %1459 = vmin.xlane.f32.xlu0 %v1458
      %v1460 = vpop.xlane.xlu0 %1459
      %vm1461 = vcmp.eq.f32.partialorder %v1458, %v1460
      %v1462 = vsel %vm1461, %v1457, inf
      %1463 = vmin.xlane.f32.xlu0 %v1462
      %v1464 = vpop.xlane.xlu0 %1463
      %v1465 = vcvt.f32.s32 %v1464
      %v1466 = vcvt.f32.s32 %v1460
      %v1467 = vshll.u32 %v1466, 16
      %v1468 = vadd.s32 %v1467, %v1465
      %v1469 = vand.u32 %v1359, 65535
      %v1470 = vshra.s32 %v1359, 16
      %v1471 = vcvt.s32.f32 %v1469
      %v1472 = vcvt.s32.f32 %v1470
      %1473 = vmin.xlane.f32.xlu0 %v1472
      %v1474 = vpop.xlane.xlu0 %1473
      %vm1475 = vcmp.eq.f32.partialorder %v1472, %v1474
      %v1476 = vsel %vm1475, %v1471, inf
      %1477 = vmin.xlane.f32.xlu0 %v1476
      %v1478 = vpop.xlane.xlu0 %1477
      %v1479 = vcvt.f32.s32 %v1478
      %v1480 = vcvt.f32.s32 %v1474
      %v1481 = vshll.u32 %v1480, 16
      %v1482 = vadd.s32 %v1481, %v1479
      %v1483 = vand.u32 %v1360, 65535
      %v1484 = vshra.s32 %v1360, 16
      %v1485 = vcvt.s32.f32 %v1483
      %v1486 = vcvt.s32.f32 %v1484
      %1487 = vmin.xlane.f32.xlu0 %v1486
      %v1488 = vpop.xlane.xlu0 %1487
      %vm1489 = vcmp.eq.f32.partialorder %v1486, %v1488
      %v1490 = vsel %vm1489, %v1485, inf
      %1491 = vmin.xlane.f32.xlu0 %v1490
      %v1492 = vpop.xlane.xlu0 %1491
      %v1493 = vcvt.f32.s32 %v1492
      %v1494 = vcvt.f32.s32 %v1488
      %v1495 = vshll.u32 %v1494, 16
      %v1496 = vadd.s32 %v1495, %v1493
      %v1497 = vand.u32 %v1361, 65535
      %v1498 = vshra.s32 %v1361, 16
      %v1499 = vcvt.s32.f32 %v1497
      %v1500 = vcvt.s32.f32 %v1498
      %1501 = vmin.xlane.f32.xlu0 %v1500
      %v1502 = vpop.xlane.xlu0 %1501
      %vm1503 = vcmp.eq.f32.partialorder %v1500, %v1502
      %v1504 = vsel %vm1503, %v1499, inf
      %1505 = vmin.xlane.f32.xlu0 %v1504
      %v1506 = vpop.xlane.xlu0 %1505
      %v1507 = vcvt.f32.s32 %v1506
      %v1508 = vcvt.f32.s32 %v1502
      %v1509 = vshll.u32 %v1508, 16
      %v1510 = vadd.s32 %v1509, %v1507
      %v1511 = vand.u32 %v1362, 65535
      %v1512 = vshra.s32 %v1362, 16
      %v1513 = vcvt.s32.f32 %v1511
      %v1514 = vcvt.s32.f32 %v1512
      %1515 = vmin.xlane.f32.xlu0 %v1514
      %v1516 = vpop.xlane.xlu0 %1515
      %vm1517 = vcmp.eq.f32.partialorder %v1514, %v1516
      %v1518 = vsel %vm1517, %v1513, inf
      %1519 = vmin.xlane.f32.xlu0 %v1518
      %v1520 = vpop.xlane.xlu0 %1519
      %v1521 = vcvt.f32.s32 %v1520
      %v1522 = vcvt.f32.s32 %v1516
      %v1523 = vshll.u32 %v1522, 16
      %v1524 = vadd.s32 %v1523, %v1521
      %v1525 = vand.u32 %v1363, 65535
      %v1526 = vshra.s32 %v1363, 16
      %v1527 = vcvt.s32.f32 %v1525
      %v1528 = vcvt.s32.f32 %v1526
      %1529 = vmin.xlane.f32.xlu0 %v1528
      %v1530 = vpop.xlane.xlu0 %1529
      %vm1531 = vcmp.eq.f32.partialorder %v1528, %v1530
      %v1532 = vsel %vm1531, %v1527, inf
      %1533 = vmin.xlane.f32.xlu0 %v1532
      %v1534 = vpop.xlane.xlu0 %1533
      %v1535 = vcvt.f32.s32 %v1534
      %v1536 = vcvt.f32.s32 %v1530
      %v1537 = vshll.u32 %v1536, 16
      %v1538 = vadd.s32 %v1537, %v1535
      %v1539 = vand.u32 %v1364, 65535
      %v1540 = vshra.s32 %v1364, 16
      %v1541 = vcvt.s32.f32 %v1539
      %v1542 = vcvt.s32.f32 %v1540
      %1543 = vmin.xlane.f32.xlu0 %v1542
      %v1544 = vpop.xlane.xlu0 %1543
      %vm1545 = vcmp.eq.f32.partialorder %v1542, %v1544
      %v1546 = vsel %vm1545, %v1541, inf
      %1547 = vmin.xlane.f32.xlu0 %v1546
      %v1548 = vpop.xlane.xlu0 %1547
      %v1549 = vcvt.f32.s32 %v1548
      %v1550 = vcvt.f32.s32 %v1544
      %v1551 = vshll.u32 %v1550, 16
      %v1552 = vadd.s32 %v1551, %v1549
      %v1553 = vand.u32 %v1365, 65535
      %v1554 = vshra.s32 %v1365, 16
      %v1555 = vcvt.s32.f32 %v1553
      %v1556 = vcvt.s32.f32 %v1554
      %1557 = vmin.xlane.f32.xlu0 %v1556
      %v1558 = vpop.xlane.xlu0 %1557
      %vm1559 = vcmp.eq.f32.partialorder %v1556, %v1558
      %v1560 = vsel %vm1559, %v1555, inf
      %1561 = vmin.xlane.f32.xlu0 %v1560
      %v1562 = vpop.xlane.xlu0 %1561
      %v1563 = vcvt.f32.s32 %v1562
      %v1564 = vcvt.f32.s32 %v1558
      %v1565 = vshll.u32 %v1564, 16
      %v1566 = vadd.s32 %v1565, %v1563
      %v1567 = vand.u32 %v1366, 65535
      %v1568 = vshra.s32 %v1366, 16
      %v1569 = vcvt.s32.f32 %v1567
      %v1570 = vcvt.s32.f32 %v1568
      %1571 = vmin.xlane.f32.xlu0 %v1570
      %v1572 = vpop.xlane.xlu0 %1571
      %vm1573 = vcmp.eq.f32.partialorder %v1570, %v1572
      %v1574 = vsel %vm1573, %v1569, inf
      %1575 = vmin.xlane.f32.xlu0 %v1574
      %v1576 = vpop.xlane.xlu0 %1575
      %v1577 = vcvt.f32.s32 %v1576
      %v1578 = vcvt.f32.s32 %v1572
      %v1579 = vshll.u32 %v1578, 16
      %v1580 = vadd.s32 %v1579, %v1577
      %v1581 = vand.u32 %v1367, 65535
      %v1582 = vshra.s32 %v1367, 16
      %v1583 = vcvt.s32.f32 %v1581
      %v1584 = vcvt.s32.f32 %v1582
      %1585 = vmin.xlane.f32.xlu0 %v1584
      %v1586 = vpop.xlane.xlu0 %1585
      %vm1587 = vcmp.eq.f32.partialorder %v1584, %v1586
      %v1588 = vsel %vm1587, %v1583, inf
      %1589 = vmin.xlane.f32.xlu0 %v1588
      %v1590 = vpop.xlane.xlu0 %1589
      %v1591 = vcvt.f32.s32 %v1590
      %v1592 = vcvt.f32.s32 %v1586
      %v1593 = vshll.u32 %v1592, 16
      %v1594 = vadd.s32 %v1593, %v1591
      %v1595 = vand.u32 %v1368, 65535
      %v1596 = vshra.s32 %v1368, 16
      %v1597 = vcvt.s32.f32 %v1595
      %v1598 = vcvt.s32.f32 %v1596
      %1599 = vmin.xlane.f32.xlu0 %v1598
      %v1600 = vpop.xlane.xlu0 %1599
      %vm1601 = vcmp.eq.f32.partialorder %v1598, %v1600
      %v1602 = vsel %vm1601, %v1597, inf
      %1603 = vmin.xlane.f32.xlu0 %v1602
      %v1604 = vpop.xlane.xlu0 %1603
      %v1605 = vcvt.f32.s32 %v1604
      %v1606 = vcvt.f32.s32 %v1600
      %v1607 = vshll.u32 %v1606, 16
      %v1608 = vadd.s32 %v1607, %v1605
      %v1609 = vand.u32 %v1369, 65535
      %v1610 = vshra.s32 %v1369, 16
      %v1611 = vcvt.s32.f32 %v1609
      %v1612 = vcvt.s32.f32 %v1610
      %1613 = vmin.xlane.f32.xlu0 %v1612
      %v1614 = vpop.xlane.xlu0 %1613
      %vm1615 = vcmp.eq.f32.partialorder %v1612, %v1614
      %v1616 = vsel %vm1615, %v1611, inf
      %1617 = vmin.xlane.f32.xlu0 %v1616
      %v1618 = vpop.xlane.xlu0 %1617
      %v1619 = vcvt.f32.s32 %v1618
      %v1620 = vcvt.f32.s32 %v1614
      %v1621 = vshll.u32 %v1620, 16
      %v1622 = vadd.s32 %v1621, %v1619
      %v1623 = vand.u32 %v1370, 65535
      %v1624 = vshra.s32 %v1370, 16
      %v1625 = vcvt.s32.f32 %v1623
      %v1626 = vcvt.s32.f32 %v1624
      %1627 = vmin.xlane.f32.xlu0 %v1626
      %v1628 = vpop.xlane.xlu0 %1627
      %vm1629 = vcmp.eq.f32.partialorder %v1626, %v1628
      %v1630 = vsel %vm1629, %v1625, inf
      %1631 = vmin.xlane.f32.xlu0 %v1630
      %v1632 = vpop.xlane.xlu0 %1631
      %v1633 = vcvt.f32.s32 %v1632
      %v1634 = vcvt.f32.s32 %v1628
      %v1635 = vshll.u32 %v1634, 16
      %v1636 = vadd.s32 %v1635, %v1633
      %v1637 = vand.u32 %v1371, 65535
      %v1638 = vshra.s32 %v1371, 16
      %v1639 = vcvt.s32.f32 %v1637
      %v1640 = vcvt.s32.f32 %v1638
      %1641 = vmin.xlane.f32.xlu0 %v1640
      %v1642 = vpop.xlane.xlu0 %1641
      %vm1643 = vcmp.eq.f32.partialorder %v1640, %v1642
      %v1644 = vsel %vm1643, %v1639, inf
      %1645 = vmin.xlane.f32.xlu0 %v1644
      %v1646 = vpop.xlane.xlu0 %1645
      %v1647 = vcvt.f32.s32 %v1646
      %v1648 = vcvt.f32.s32 %v1642
      %v1649 = vshll.u32 %v1648, 16
      %v1650 = vadd.s32 %v1649, %v1647
      %v1651 = vand.u32 %v1372, 65535
      %v1652 = vshra.s32 %v1372, 16
      %v1653 = vcvt.s32.f32 %v1651
      %v1654 = vcvt.s32.f32 %v1652
      %1655 = vmin.xlane.f32.xlu0 %v1654
      %v1656 = vpop.xlane.xlu0 %1655
      %vm1657 = vcmp.eq.f32.partialorder %v1654, %v1656
      %v1658 = vsel %vm1657, %v1653, inf
      %1659 = vmin.xlane.f32.xlu0 %v1658
      %v1660 = vpop.xlane.xlu0 %1659
      %v1661 = vcvt.f32.s32 %v1660
      %v1662 = vcvt.f32.s32 %v1656
      %v1663 = vshll.u32 %v1662, 16
      %v1664 = vadd.s32 %v1663, %v1661
      %v1665 = vand.u32 %v1373, 65535
      %v1666 = vshra.s32 %v1373, 16
      %v1667 = vcvt.s32.f32 %v1665
      %v1668 = vcvt.s32.f32 %v1666
      %1669 = vmin.xlane.f32.xlu0 %v1668
      %v1670 = vpop.xlane.xlu0 %1669
      %vm1671 = vcmp.eq.f32.partialorder %v1668, %v1670
      %v1672 = vsel %vm1671, %v1667, inf
      %1673 = vmin.xlane.f32.xlu0 %v1672
      %v1674 = vpop.xlane.xlu0 %1673
      %v1675 = vcvt.f32.s32 %v1674
      %v1676 = vcvt.f32.s32 %v1670
      %v1677 = vshll.u32 %v1676, 16
      %v1678 = vadd.s32 %v1677, %v1675
      %v1679 = vand.u32 %v1374, 65535
      %v1680 = vshra.s32 %v1374, 16
      %v1681 = vcvt.s32.f32 %v1679
      %v1682 = vcvt.s32.f32 %v1680
      %1683 = vmin.xlane.f32.xlu0 %v1682
      %v1684 = vpop.xlane.xlu0 %1683
      %vm1685 = vcmp.eq.f32.partialorder %v1682, %v1684
      %v1686 = vsel %vm1685, %v1681, inf
      %1687 = vmin.xlane.f32.xlu0 %v1686
      %v1688 = vpop.xlane.xlu0 %1687
      %v1689 = vcvt.f32.s32 %v1688
      %v1690 = vcvt.f32.s32 %v1684
      %v1691 = vshll.u32 %v1690, 16
      %v1692 = vadd.s32 %v1691, %v1689
      %v1693 = vand.u32 %v1375, 65535
      %v1694 = vshra.s32 %v1375, 16
      %v1695 = vcvt.s32.f32 %v1693
      %v1696 = vcvt.s32.f32 %v1694
      %1697 = vmin.xlane.f32.xlu0 %v1696
      %v1698 = vpop.xlane.xlu0 %1697
      %vm1699 = vcmp.eq.f32.partialorder %v1696, %v1698
      %v1700 = vsel %vm1699, %v1695, inf
      %1701 = vmin.xlane.f32.xlu0 %v1700
      %v1702 = vpop.xlane.xlu0 %1701
      %v1703 = vcvt.f32.s32 %v1702
      %v1704 = vcvt.f32.s32 %v1698
      %v1705 = vshll.u32 %v1704, 16
      %v1706 = vadd.s32 %v1705, %v1703
      %v1707 = vand.u32 %v1376, 65535
      %v1708 = vshra.s32 %v1376, 16
      %v1709 = vcvt.s32.f32 %v1707
      %v1710 = vcvt.s32.f32 %v1708
      %1711 = vmin.xlane.f32.xlu0 %v1710
      %v1712 = vpop.xlane.xlu0 %1711
      %vm1713 = vcmp.eq.f32.partialorder %v1710, %v1712
      %v1714 = vsel %vm1713, %v1709, inf
      %1715 = vmin.xlane.f32.xlu0 %v1714
      %v1716 = vpop.xlane.xlu0 %1715
      %v1717 = vcvt.f32.s32 %v1716
      %v1718 = vcvt.f32.s32 %v1712
      %v1719 = vshll.u32 %v1718, 16
      %v1720 = vadd.s32 %v1719, %v1717
      %v1721 = vand.u32 %v1377, 65535
      %v1722 = vshra.s32 %v1377, 16
      %v1723 = vcvt.s32.f32 %v1721
      %v1724 = vcvt.s32.f32 %v1722
      %1725 = vmin.xlane.f32.xlu0 %v1724
      %v1726 = vpop.xlane.xlu0 %1725
      %vm1727 = vcmp.eq.f32.partialorder %v1724, %v1726
      %v1728 = vsel %vm1727, %v1723, inf
      %1729 = vmin.xlane.f32.xlu0 %v1728
      %v1730 = vpop.xlane.xlu0 %1729
      %v1731 = vcvt.f32.s32 %v1730
      %v1732 = vcvt.f32.s32 %v1726
      %v1733 = vshll.u32 %v1732, 16
      %v1734 = vadd.s32 %v1733, %v1731
      %v1735 = vand.u32 %v1378, 65535
      %v1736 = vshra.s32 %v1378, 16
      %v1737 = vcvt.s32.f32 %v1735
      %v1738 = vcvt.s32.f32 %v1736
      %1739 = vmin.xlane.f32.xlu0 %v1738
      %v1740 = vpop.xlane.xlu0 %1739
      %vm1741 = vcmp.eq.f32.partialorder %v1738, %v1740
      %v1742 = vsel %vm1741, %v1737, inf
      %1743 = vmin.xlane.f32.xlu0 %v1742
      %v1744 = vpop.xlane.xlu0 %1743
      %v1745 = vcvt.f32.s32 %v1744
      %v1746 = vcvt.f32.s32 %v1740
      %v1747 = vshll.u32 %v1746, 16
      %v1748 = vadd.s32 %v1747, %v1745
      %v1749 = vand.u32 %v1379, 65535
      %v1750 = vshra.s32 %v1379, 16
      %v1751 = vcvt.s32.f32 %v1749
      %v1752 = vcvt.s32.f32 %v1750
      %1753 = vmin.xlane.f32.xlu0 %v1752
      %v1754 = vpop.xlane.xlu0 %1753
      %vm1755 = vcmp.eq.f32.partialorder %v1752, %v1754
      %v1756 = vsel %vm1755, %v1751, inf
      %1757 = vmin.xlane.f32.xlu0 %v1756
      %v1758 = vpop.xlane.xlu0 %1757
      %v1759 = vcvt.f32.s32 %v1758
      %v1760 = vcvt.f32.s32 %v1754
      %v1761 = vshll.u32 %v1760, 16
      %v1762 = vadd.s32 %v1761, %v1759
      %v1763 = vand.u32 %v1380, 65535
      %v1764 = vshra.s32 %v1380, 16
      %v1765 = vcvt.s32.f32 %v1763
      %v1766 = vcvt.s32.f32 %v1764
      %1767 = vmin.xlane.f32.xlu0 %v1766
      %v1768 = vpop.xlane.xlu0 %1767
      %vm1769 = vcmp.eq.f32.partialorder %v1766, %v1768
      %v1770 = vsel %vm1769, %v1765, inf
      %1771 = vmin.xlane.f32.xlu0 %v1770
      %v1772 = vpop.xlane.xlu0 %1771
      %v1773 = vcvt.f32.s32 %v1772
      %v1774 = vcvt.f32.s32 %v1768
      %v1775 = vshll.u32 %v1774, 16
      %v1776 = vadd.s32 %v1775, %v1773
      %v1777 = vand.u32 %v1381, 65535
      %v1778 = vshra.s32 %v1381, 16
      %v1779 = vcvt.s32.f32 %v1777
      %v1780 = vcvt.s32.f32 %v1778
      %1781 = vmin.xlane.f32.xlu0 %v1780
      %v1782 = vpop.xlane.xlu0 %1781
      %vm1783 = vcmp.eq.f32.partialorder %v1780, %v1782
      %v1784 = vsel %vm1783, %v1779, inf
      %1785 = vmin.xlane.f32.xlu0 %v1784
      %v1786 = vpop.xlane.xlu0 %1785
      %v1787 = vcvt.f32.s32 %v1786
      %v1788 = vcvt.f32.s32 %v1782
      %v1789 = vshll.u32 %v1788, 16
      %v1790 = vadd.s32 %v1789, %v1787
      %v1791 = vand.u32 %v1382, 65535
      %v1792 = vshra.s32 %v1382, 16
      %v1793 = vcvt.s32.f32 %v1791
      %v1794 = vcvt.s32.f32 %v1792
      %1795 = vmin.xlane.f32.xlu0 %v1794
      %v1796 = vpop.xlane.xlu0 %1795
      %vm1797 = vcmp.eq.f32.partialorder %v1794, %v1796
      %v1798 = vsel %vm1797, %v1793, inf
      %1799 = vmin.xlane.f32.xlu0 %v1798
      %v1800 = vpop.xlane.xlu0 %1799
      %v1801 = vcvt.f32.s32 %v1800
      %v1802 = vcvt.f32.s32 %v1796
      %v1803 = vshll.u32 %v1802, 16
      %v1804 = vadd.s32 %v1803, %v1801
      %v1805 = vand.u32 %v1383, 65535
      %v1806 = vshra.s32 %v1383, 16
      %v1807 = vcvt.s32.f32 %v1805
      %v1808 = vcvt.s32.f32 %v1806
      %1809 = vmin.xlane.f32.xlu0 %v1808
      %v1810 = vpop.xlane.xlu0 %1809
      %vm1811 = vcmp.eq.f32.partialorder %v1808, %v1810
      %v1812 = vsel %vm1811, %v1807, inf
      %1813 = vmin.xlane.f32.xlu0 %v1812
      %v1814 = vpop.xlane.xlu0 %1813
      %v1815 = vcvt.f32.s32 %v1814
      %v1816 = vcvt.f32.s32 %v1810
      %v1817 = vshll.u32 %v1816, 16
      %v1818 = vadd.s32 %v1817, %v1815
      %v1819 = vand.u32 %v1384, 65535
      %v1820 = vshra.s32 %v1384, 16
      %v1821 = vcvt.s32.f32 %v1819
      %v1822 = vcvt.s32.f32 %v1820
      %1823 = vmin.xlane.f32.xlu0 %v1822
      %v1824 = vpop.xlane.xlu0 %1823
      %vm1825 = vcmp.eq.f32.partialorder %v1822, %v1824
      %v1826 = vsel %vm1825, %v1821, inf
      %1827 = vmin.xlane.f32.xlu0 %v1826
      %v1828 = vpop.xlane.xlu0 %1827
      %v1829 = vcvt.f32.s32 %v1828
      %v1830 = vcvt.f32.s32 %v1824
      %v1831 = vshll.u32 %v1830, 16
      %v1832 = vadd.s32 %v1831, %v1829
      %s1833 = sadd.s32 %s1186, 1
      %s1834 = scalar_lea.vmem [#allocation2], %s1833
      %v1835 = vld [vmem:[%s1834] sm:$0x1]
      %v1836 = vld [vmem:[%s1834 + $0x8] sm:$0x1]
      %v1837 = vstv %s1186
      %vm1838 = vcmp.lt.s32.totalorder %v1837, %v1163
      %v1841 = vlaneseq
      %v1842 = vshrl.u32 %v1841, 7
      %v1843 = vsub.s32 0, %v1842
      %v1844 = vrot.slane %v1835, %v1843
      %1846 = vbcast.lane.b32.xlu0 %v1844, 256
      %v1847 = vpop.permute.xlu0 %1846
      %s1849 = sor.u32 256, 8
      %1850 = vbcast.lane.b32.xlu0 %v1844, %s1849
      %v1851 = vpop.permute.xlu0 %1850
      %s1853 = sor.u32 256, 16
      %1854 = vbcast.lane.b32.xlu0 %v1844, %s1853
      %v1855 = vpop.permute.xlu0 %1854
      %s1857 = sor.u32 256, 24
      %1858 = vbcast.lane.b32.xlu0 %v1844, %s1857
      %v1859 = vpop.permute.xlu0 %1858
      %s1861 = sor.u32 256, 32
      %1862 = vbcast.lane.b32.xlu0 %v1844, %s1861
      %v1863 = vpop.permute.xlu0 %1862
      %s1865 = sor.u32 256, 40
      %1866 = vbcast.lane.b32.xlu0 %v1844, %s1865
      %v1867 = vpop.permute.xlu0 %1866
      %s1869 = sor.u32 256, 48
      %1870 = vbcast.lane.b32.xlu0 %v1844, %s1869
      %v1871 = vpop.permute.xlu0 %1870
      %s1873 = sor.u32 256, 56
      %1874 = vbcast.lane.b32.xlu0 %v1844, %s1873
      %v1875 = vpop.permute.xlu0 %1874
      %s1877 = sor.u32 256, 64
      %1878 = vbcast.lane.b32.xlu0 %v1844, %s1877
      %v1879 = vpop.permute.xlu0 %1878
      %s1881 = sor.u32 256, 72
      %1882 = vbcast.lane.b32.xlu0 %v1844, %s1881
      %v1883 = vpop.permute.xlu0 %1882
      %s1885 = sor.u32 256, 80
      %1886 = vbcast.lane.b32.xlu0 %v1844, %s1885
      %v1887 = vpop.permute.xlu0 %1886
      %s1889 = sor.u32 256, 88
      %1890 = vbcast.lane.b32.xlu0 %v1844, %s1889
      %v1891 = vpop.permute.xlu0 %1890
      %s1893 = sor.u32 256, 96
      %1894 = vbcast.lane.b32.xlu0 %v1844, %s1893
      %v1895 = vpop.permute.xlu0 %1894
      %s1897 = sor.u32 256, 104
      %1898 = vbcast.lane.b32.xlu0 %v1844, %s1897
      %v1899 = vpop.permute.xlu0 %1898
      %s1901 = sor.u32 256, 112
      %1902 = vbcast.lane.b32.xlu0 %v1844, %s1901
      %v1903 = vpop.permute.xlu0 %1902
      %s1905 = sor.u32 256, 120
      %1906 = vbcast.lane.b32.xlu0 %v1844, %s1905
      %v1907 = vpop.permute.xlu0 %1906
      %v1908 = vlaneseq
      %v1909 = vshrl.u32 %v1908, 7
      %v1910 = vsub.s32 0, %v1909
      %v1911 = vrot.slane %v1836, %v1910
      %1913 = vbcast.lane.b32.xlu0 %v1911, 256
      %v1914 = vpop.permute.xlu0 %1913
      %s1916 = sor.u32 256, 8
      %1917 = vbcast.lane.b32.xlu0 %v1911, %s1916
      %v1918 = vpop.permute.xlu0 %1917
      %s1920 = sor.u32 256, 16
      %1921 = vbcast.lane.b32.xlu0 %v1911, %s1920
      %v1922 = vpop.permute.xlu0 %1921
      %s1924 = sor.u32 256, 24
      %1925 = vbcast.lane.b32.xlu0 %v1911, %s1924
      %v1926 = vpop.permute.xlu0 %1925
      %s1928 = sor.u32 256, 32
      %1929 = vbcast.lane.b32.xlu0 %v1911, %s1928
      %v1930 = vpop.permute.xlu0 %1929
      %s1932 = sor.u32 256, 40
      %1933 = vbcast.lane.b32.xlu0 %v1911, %s1932
      %v1934 = vpop.permute.xlu0 %1933
      %s1936 = sor.u32 256, 48
      %1937 = vbcast.lane.b32.xlu0 %v1911, %s1936
      %v1938 = vpop.permute.xlu0 %1937
      %s1940 = sor.u32 256, 56
      %1941 = vbcast.lane.b32.xlu0 %v1911, %s1940
      %v1942 = vpop.permute.xlu0 %1941
      %s1944 = sor.u32 256, 64
      %1945 = vbcast.lane.b32.xlu0 %v1911, %s1944
      %v1946 = vpop.permute.xlu0 %1945
      %s1948 = sor.u32 256, 72
      %1949 = vbcast.lane.b32.xlu0 %v1911, %s1948
      %v1950 = vpop.permute.xlu0 %1949
      %s1952 = sor.u32 256, 80
      %1953 = vbcast.lane.b32.xlu0 %v1911, %s1952
      %v1954 = vpop.permute.xlu0 %1953
      %s1956 = sor.u32 256, 88
      %1957 = vbcast.lane.b32.xlu0 %v1911, %s1956
      %v1958 = vpop.permute.xlu0 %1957
      %s1960 = sor.u32 256, 96
      %1961 = vbcast.lane.b32.xlu0 %v1911, %s1960
      %v1962 = vpop.permute.xlu0 %1961
      %s1964 = sor.u32 256, 104
      %1965 = vbcast.lane.b32.xlu0 %v1911, %s1964
      %v1966 = vpop.permute.xlu0 %1965
      %s1968 = sor.u32 256, 112
      %1969 = vbcast.lane.b32.xlu0 %v1911, %s1968
      %v1970 = vpop.permute.xlu0 %1969
      %s1972 = sor.u32 256, 120
      %1973 = vbcast.lane.b32.xlu0 %v1911, %s1972
      %v1974 = vpop.permute.xlu0 %1973
      %v2007 = vadd.f32 %v1258, %v1847
      %v2008 = vadd.f32 %v1260, %v1851
      %v2009 = vadd.f32 %v1262, %v1855
      %v2010 = vadd.f32 %v1264, %v1859
      %v2011 = vadd.f32 %v1266, %v1863
      %v2012 = vadd.f32 %v1268, %v1867
      %v2013 = vadd.f32 %v1270, %v1871
      %v2014 = vadd.f32 %v1272, %v1875
      %v2015 = vadd.f32 %v1274, %v1879
      %v2016 = vadd.f32 %v1276, %v1883
      %v2017 = vadd.f32 %v1278, %v1887
      %v2018 = vadd.f32 %v1280, %v1891
      %v2019 = vadd.f32 %v1282, %v1895
      %v2020 = vadd.f32 %v1284, %v1899
      %v2021 = vadd.f32 %v1286, %v1903
      %v2022 = vadd.f32 %v1288, %v1907
      %v2023 = vadd.f32 %v1290, %v1914
      %v2024 = vadd.f32 %v1292, %v1918
      %v2025 = vadd.f32 %v1294, %v1922
      %v2026 = vadd.f32 %v1296, %v1926
      %v2027 = vadd.f32 %v1298, %v1930
      %v2028 = vadd.f32 %v1300, %v1934
      %v2029 = vadd.f32 %v1302, %v1938
      %v2030 = vadd.f32 %v1304, %v1942
      %v2031 = vadd.f32 %v1306, %v1946
      %v2032 = vadd.f32 %v1308, %v1950
      %v2033 = vadd.f32 %v1310, %v1954
      %v2034 = vadd.f32 %v1312, %v1958
      %v2035 = vadd.f32 %v1314, %v1962
      %v2036 = vadd.f32 %v1316, %v1966
      %v2037 = vadd.f32 %v1318, %v1970
      %v2038 = vadd.f32 %v1320, %v1974
      %v2039 = vsel %vm1838, 1, 0
      %2040 = vset.pattern.permute.xlu0 0
      %2041 = vperm.xlu0 %2040, %v2039
      %v2042 = vpop.permute.xlu0 %2041
      %vm2043 = vcmp.eq.s32.totalorder %v2042, 1
      %2076 = vset.pattern.permute.xlu0 0
      %2077 = vperm.xlu0 %2076, %v2007
      %v2078 = vpop.permute.xlu0 %2077
      %2079 = vset.pattern.permute.xlu0 0
      %2080 = vperm.xlu0 %2079, %v2008
      %v2081 = vpop.permute.xlu0 %2080
      %2082 = vset.pattern.permute.xlu0 0
      %2083 = vperm.xlu0 %2082, %v2009
      %v2084 = vpop.permute.xlu0 %2083
      %2085 = vset.pattern.permute.xlu0 0
      %2086 = vperm.xlu0 %2085, %v2010
      %v2087 = vpop.permute.xlu0 %2086
      %2088 = vset.pattern.permute.xlu0 0
      %2089 = vperm.xlu0 %2088, %v2011
      %v2090 = vpop.permute.xlu0 %2089
      %2091 = vset.pattern.permute.xlu0 0
      %2092 = vperm.xlu0 %2091, %v2012
      %v2093 = vpop.permute.xlu0 %2092
      %2094 = vset.pattern.permute.xlu0 0
      %2095 = vperm.xlu0 %2094, %v2013
      %v2096 = vpop.permute.xlu0 %2095
      %2097 = vset.pattern.permute.xlu0 0
      %2098 = vperm.xlu0 %2097, %v2014
      %v2099 = vpop.permute.xlu0 %2098
      %2100 = vset.pattern.permute.xlu0 0
      %2101 = vperm.xlu0 %2100, %v2015
      %v2102 = vpop.permute.xlu0 %2101
      %2103 = vset.pattern.permute.xlu0 0
      %2104 = vperm.xlu0 %2103, %v2016
      %v2105 = vpop.permute.xlu0 %2104
      %2106 = vset.pattern.permute.xlu0 0
      %2107 = vperm.xlu0 %2106, %v2017
      %v2108 = vpop.permute.xlu0 %2107
      %2109 = vset.pattern.permute.xlu0 0
      %2110 = vperm.xlu0 %2109, %v2018
      %v2111 = vpop.permute.xlu0 %2110
      %2112 = vset.pattern.permute.xlu0 0
      %2113 = vperm.xlu0 %2112, %v2019
      %v2114 = vpop.permute.xlu0 %2113
      %2115 = vset.pattern.permute.xlu0 0
      %2116 = vperm.xlu0 %2115, %v2020
      %v2117 = vpop.permute.xlu0 %2116
      %2118 = vset.pattern.permute.xlu0 0
      %2119 = vperm.xlu0 %2118, %v2021
      %v2120 = vpop.permute.xlu0 %2119
      %2121 = vset.pattern.permute.xlu0 0
      %2122 = vperm.xlu0 %2121, %v2022
      %v2123 = vpop.permute.xlu0 %2122
      %2124 = vset.pattern.permute.xlu0 0
      %2125 = vperm.xlu0 %2124, %v2023
      %v2126 = vpop.permute.xlu0 %2125
      %2127 = vset.pattern.permute.xlu0 0
      %2128 = vperm.xlu0 %2127, %v2024
      %v2129 = vpop.permute.xlu0 %2128
      %2130 = vset.pattern.permute.xlu0 0
      %2131 = vperm.xlu0 %2130, %v2025
      %v2132 = vpop.permute.xlu0 %2131
      %2133 = vset.pattern.permute.xlu0 0
      %2134 = vperm.xlu0 %2133, %v2026
      %v2135 = vpop.permute.xlu0 %2134
      %2136 = vset.pattern.permute.xlu0 0
      %2137 = vperm.xlu0 %2136, %v2027
      %v2138 = vpop.permute.xlu0 %2137
      %2139 = vset.pattern.permute.xlu0 0
      %2140 = vperm.xlu0 %2139, %v2028
      %v2141 = vpop.permute.xlu0 %2140
      %2142 = vset.pattern.permute.xlu0 0
      %2143 = vperm.xlu0 %2142, %v2029
      %v2144 = vpop.permute.xlu0 %2143
      %2145 = vset.pattern.permute.xlu0 0
      %2146 = vperm.xlu0 %2145, %v2030
      %v2147 = vpop.permute.xlu0 %2146
      %2148 = vset.pattern.permute.xlu0 0
      %2149 = vperm.xlu0 %2148, %v2031
      %v2150 = vpop.permute.xlu0 %2149
      %2151 = vset.pattern.permute.xlu0 0
      %2152 = vperm.xlu0 %2151, %v2032
      %v2153 = vpop.permute.xlu0 %2152
      %2154 = vset.pattern.permute.xlu0 0
      %2155 = vperm.xlu0 %2154, %v2033
      %v2156 = vpop.permute.xlu0 %2155
      %2157 = vset.pattern.permute.xlu0 0
      %2158 = vperm.xlu0 %2157, %v2034
      %v2159 = vpop.permute.xlu0 %2158
      %2160 = vset.pattern.permute.xlu0 0
      %2161 = vperm.xlu0 %2160, %v2035
      %v2162 = vpop.permute.xlu0 %2161
      %2163 = vset.pattern.permute.xlu0 0
      %2164 = vperm.xlu0 %2163, %v2036
      %v2165 = vpop.permute.xlu0 %2164
      %2166 = vset.pattern.permute.xlu0 0
      %2167 = vperm.xlu0 %2166, %v2037
      %v2168 = vpop.permute.xlu0 %2167
      %2169 = vset.pattern.permute.xlu0 0
      %2170 = vperm.xlu0 %2169, %v2038
      %v2171 = vpop.permute.xlu0 %2170
      %v2172 = vlaneseq
      %v2173 = vshrl.u32 %v2172, 7
      %v2174 = vsub.s32 %v1165, %v2173
      %v2175 = vrot.slane %v2078, %v2174
      %v2176 = vadd.s32 %v1165, 4294967288
      %v2177 = vlaneseq
      %v2178 = vshrl.u32 %v2177, 7
      %v2179 = vsub.s32 %v2176, %v2178
      %v2180 = vrot.slane %v2081, %v2179
      %vm2181 = vcmask 130112
      %v2182 = vsel %vm2181, %v2180, %v2175
      %v2183 = vadd.s32 %v1165, 4294967280
      %v2184 = vlaneseq
      %v2185 = vshrl.u32 %v2184, 7
      %v2186 = vsub.s32 %v2183, %v2185
      %v2187 = vrot.slane %v2084, %v2186
      %vm2188 = vcmask 195712
      %v2189 = vsel %vm2188, %v2187, %v2182
      %v2190 = vadd.s32 %v1165, 4294967272
      %v2191 = vlaneseq
      %v2192 = vshrl.u32 %v2191, 7
      %v2193 = vsub.s32 %v2190, %v2192
      %v2194 = vrot.slane %v2087, %v2193
      %vm2195 = vcmask 261312
      %v2196 = vsel %vm2195, %v2194, %v2189
      %v2197 = vadd.s32 %v1165, 4294967264
      %v2198 = vlaneseq
      %v2199 = vshrl.u32 %v2198, 7
      %v2200 = vsub.s32 %v2197, %v2199
      %v2201 = vrot.slane %v2090, %v2200
      %vm2202 = vcmask 326912
      %v2203 = vsel %vm2202, %v2201, %v2196
      %v2204 = vadd.s32 %v1165, 4294967256
      %v2205 = vlaneseq
      %v2206 = vshrl.u32 %v2205, 7
      %v2207 = vsub.s32 %v2204, %v2206
      %v2208 = vrot.slane %v2093, %v2207
      %vm2209 = vcmask 392512
      %v2210 = vsel %vm2209, %v2208, %v2203
      %v2211 = vadd.s32 %v1165, 4294967248
      %v2212 = vlaneseq
      %v2213 = vshrl.u32 %v2212, 7
      %v2214 = vsub.s32 %v2211, %v2213
      %v2215 = vrot.slane %v2096, %v2214
      %vm2216 = vcmask 458112
      %v2217 = vsel %vm2216, %v2215, %v2210
      %v2218 = vadd.s32 %v1165, 4294967240
      %v2219 = vlaneseq
      %v2220 = vshrl.u32 %v2219, 7
      %v2221 = vsub.s32 %v2218, %v2220
      %v2222 = vrot.slane %v2099, %v2221
      %vm2223 = vcmask 523712
      %v2224 = vsel %vm2223, %v2222, %v2217
      %v2225 = vadd.s32 %v1165, 4294967232
      %v2226 = vlaneseq
      %v2227 = vshrl.u32 %v2226, 7
      %v2228 = vsub.s32 %v2225, %v2227
      %v2229 = vrot.slane %v2102, %v2228
      %vm2230 = vcmask 589312
      %v2231 = vsel %vm2230, %v2229, %v2224
      %v2232 = vadd.s32 %v1165, 4294967224
      %v2233 = vlaneseq
      %v2234 = vshrl.u32 %v2233, 7
      %v2235 = vsub.s32 %v2232, %v2234
      %v2236 = vrot.slane %v2105, %v2235
      %vm2237 = vcmask 654912
      %v2238 = vsel %vm2237, %v2236, %v2231
      %v2239 = vadd.s32 %v1165, 4294967216
      %v2240 = vlaneseq
      %v2241 = vshrl.u32 %v2240, 7
      %v2242 = vsub.s32 %v2239, %v2241
      %v2243 = vrot.slane %v2108, %v2242
      %vm2244 = vcmask 720512
      %v2245 = vsel %vm2244, %v2243, %v2238
      %v2246 = vadd.s32 %v1165, 4294967208
      %v2247 = vlaneseq
      %v2248 = vshrl.u32 %v2247, 7
      %v2249 = vsub.s32 %v2246, %v2248
      %v2250 = vrot.slane %v2111, %v2249
      %vm2251 = vcmask 786112
      %v2252 = vsel %vm2251, %v2250, %v2245
      %v2253 = vadd.s32 %v1165, 4294967200
      %v2254 = vlaneseq
      %v2255 = vshrl.u32 %v2254, 7
      %v2256 = vsub.s32 %v2253, %v2255
      %v2257 = vrot.slane %v2114, %v2256
      %vm2258 = vcmask 851712
      %v2259 = vsel %vm2258, %v2257, %v2252
      %v2260 = vadd.s32 %v1165, 4294967192
      %v2261 = vlaneseq
      %v2262 = vshrl.u32 %v2261, 7
      %v2263 = vsub.s32 %v2260, %v2262
      %v2264 = vrot.slane %v2117, %v2263
      %vm2265 = vcmask 917312
      %v2266 = vsel %vm2265, %v2264, %v2259
      %v2267 = vadd.s32 %v1165, 4294967184
      %v2268 = vlaneseq
      %v2269 = vshrl.u32 %v2268, 7
      %v2270 = vsub.s32 %v2267, %v2269
      %v2271 = vrot.slane %v2120, %v2270
      %vm2272 = vcmask 982912
      %v2273 = vsel %vm2272, %v2271, %v2266
      %v2274 = vadd.s32 %v1165, 4294967176
      %v2275 = vlaneseq
      %v2276 = vshrl.u32 %v2275, 7
      %v2277 = vsub.s32 %v2274, %v2276
      %v2278 = vrot.slane %v2123, %v2277
      %vm2279 = vcmask 1048512
      %v2280 = vsel %vm2279, %v2278, %v2273
      %v2281 = vlaneseq
      %v2282 = vshrl.u32 %v2281, 7
      %v2283 = vsub.s32 %v1165, %v2282
      %v2284 = vrot.slane %v2126, %v2283
      %v2285 = vlaneseq
      %v2286 = vshrl.u32 %v2285, 7
      %v2287 = vsub.s32 %v2176, %v2286
      %v2288 = vrot.slane %v2129, %v2287
      %v2289 = vsel %vm2181, %v2288, %v2284
      %v2290 = vlaneseq
      %v2291 = vshrl.u32 %v2290, 7
      %v2292 = vsub.s32 %v2183, %v2291
      %v2293 = vrot.slane %v2132, %v2292
      %v2294 = vsel %vm2188, %v2293, %v2289
      %v2295 = vlaneseq
      %v2296 = vshrl.u32 %v2295, 7
      %v2297 = vsub.s32 %v2190, %v2296
      %v2298 = vrot.slane %v2135, %v2297
      %v2299 = vsel %vm2195, %v2298, %v2294
      %v2300 = vlaneseq
      %v2301 = vshrl.u32 %v2300, 7
      %v2302 = vsub.s32 %v2197, %v2301
      %v2303 = vrot.slane %v2138, %v2302
      %v2304 = vsel %vm2202, %v2303, %v2299
      %v2305 = vlaneseq
      %v2306 = vshrl.u32 %v2305, 7
      %v2307 = vsub.s32 %v2204, %v2306
      %v2308 = vrot.slane %v2141, %v2307
      %v2309 = vsel %vm2209, %v2308, %v2304
      %v2310 = vlaneseq
      %v2311 = vshrl.u32 %v2310, 7
      %v2312 = vsub.s32 %v2211, %v2311
      %v2313 = vrot.slane %v2144, %v2312
      %v2314 = vsel %vm2216, %v2313, %v2309
      %v2315 = vlaneseq
      %v2316 = vshrl.u32 %v2315, 7
      %v2317 = vsub.s32 %v2218, %v2316
      %v2318 = vrot.slane %v2147, %v2317
      %v2319 = vsel %vm2223, %v2318, %v2314
      %v2320 = vlaneseq
      %v2321 = vshrl.u32 %v2320, 7
      %v2322 = vsub.s32 %v2225, %v2321
      %v2323 = vrot.slane %v2150, %v2322
      %v2324 = vsel %vm2230, %v2323, %v2319
      %v2325 = vlaneseq
      %v2326 = vshrl.u32 %v2325, 7
      %v2327 = vsub.s32 %v2232, %v2326
      %v2328 = vrot.slane %v2153, %v2327
      %v2329 = vsel %vm2237, %v2328, %v2324
      %v2330 = vlaneseq
      %v2331 = vshrl.u32 %v2330, 7
      %v2332 = vsub.s32 %v2239, %v2331
      %v2333 = vrot.slane %v2156, %v2332
      %v2334 = vsel %vm2244, %v2333, %v2329
      %v2335 = vlaneseq
      %v2336 = vshrl.u32 %v2335, 7
      %v2337 = vsub.s32 %v2246, %v2336
      %v2338 = vrot.slane %v2159, %v2337
      %v2339 = vsel %vm2251, %v2338, %v2334
      %v2340 = vlaneseq
      %v2341 = vshrl.u32 %v2340, 7
      %v2342 = vsub.s32 %v2253, %v2341
      %v2343 = vrot.slane %v2162, %v2342
      %v2344 = vsel %vm2258, %v2343, %v2339
      %v2345 = vlaneseq
      %v2346 = vshrl.u32 %v2345, 7
      %v2347 = vsub.s32 %v2260, %v2346
      %v2348 = vrot.slane %v2165, %v2347
      %v2349 = vsel %vm2265, %v2348, %v2344
      %v2350 = vlaneseq
      %v2351 = vshrl.u32 %v2350, 7
      %v2352 = vsub.s32 %v2267, %v2351
      %v2353 = vrot.slane %v2168, %v2352
      %v2354 = vsel %vm2272, %v2353, %v2349
      %v2355 = vlaneseq
      %v2356 = vshrl.u32 %v2355, 7
      %v2357 = vsub.s32 %v2274, %v2356
      %v2358 = vrot.slane %v2171, %v2357
      %v2359 = vsel %vm2279, %v2358, %v2354
      %vm2360 = vcmask 1041409
      %v2361 = vsel %vm2360, %v2359, %v2280
      %v2363 = vsel %vm2043, %v2361, %v1191
      %2364 = vst [vmem:[#allocation3] sm:$0x3] %v2363
      %v2365 = vlaneseq
      %v2366 = vshrl.u32 %v2365, 7
      %v2367 = vsub.s32 %v1165, %v2366
      %v2368 = vrot.slane %v1398, %v2367
      %v2369 = vlaneseq
      %v2370 = vshrl.u32 %v2369, 7
      %v2371 = vsub.s32 %v2176, %v2370
      %v2372 = vrot.slane %v1412, %v2371
      %v2373 = vsel %vm2181, %v2372, %v2368
      %v2374 = vlaneseq
      %v2375 = vshrl.u32 %v2374, 7
      %v2376 = vsub.s32 %v2183, %v2375
      %v2377 = vrot.slane %v1426, %v2376
      %v2378 = vsel %vm2188, %v2377, %v2373
      %v2379 = vlaneseq
      %v2380 = vshrl.u32 %v2379, 7
      %v2381 = vsub.s32 %v2190, %v2380
      %v2382 = vrot.slane %v1440, %v2381
      %v2383 = vsel %vm2195, %v2382, %v2378
      %v2384 = vlaneseq
      %v2385 = vshrl.u32 %v2384, 7
      %v2386 = vsub.s32 %v2197, %v2385
      %v2387 = vrot.slane %v1454, %v2386
      %v2388 = vsel %vm2202, %v2387, %v2383
      %v2389 = vlaneseq
      %v2390 = vshrl.u32 %v2389, 7
      %v2391 = vsub.s32 %v2204, %v2390
      %v2392 = vrot.slane %v1468, %v2391
      %v2393 = vsel %vm2209, %v2392, %v2388
      %v2394 = vlaneseq
      %v2395 = vshrl.u32 %v2394, 7
      %v2396 = vsub.s32 %v2211, %v2395
      %v2397 = vrot.slane %v1482, %v2396
      %v2398 = vsel %vm2216, %v2397, %v2393
      %v2399 = vlaneseq
      %v2400 = vshrl.u32 %v2399, 7
      %v2401 = vsub.s32 %v2218, %v2400
      %v2402 = vrot.slane %v1496, %v2401
      %v2403 = vsel %vm2223, %v2402, %v2398
      %v2404 = vlaneseq
      %v2405 = vshrl.u32 %v2404, 7
      %v2406 = vsub.s32 %v2225, %v2405
      %v2407 = vrot.slane %v1510, %v2406
      %v2408 = vsel %vm2230, %v2407, %v2403
      %v2409 = vlaneseq
      %v2410 = vshrl.u32 %v2409, 7
      %v2411 = vsub.s32 %v2232, %v2410
      %v2412 = vrot.slane %v1524, %v2411
      %v2413 = vsel %vm2237, %v2412, %v2408
      %v2414 = vlaneseq
      %v2415 = vshrl.u32 %v2414, 7
      %v2416 = vsub.s32 %v2239, %v2415
      %v2417 = vrot.slane %v1538, %v2416
      %v2418 = vsel %vm2244, %v2417, %v2413
      %v2419 = vlaneseq
      %v2420 = vshrl.u32 %v2419, 7
      %v2421 = vsub.s32 %v2246, %v2420
      %v2422 = vrot.slane %v1552, %v2421
      %v2423 = vsel %vm2251, %v2422, %v2418
      %v2424 = vlaneseq
      %v2425 = vshrl.u32 %v2424, 7
      %v2426 = vsub.s32 %v2253, %v2425
      %v2427 = vrot.slane %v1566, %v2426
      %v2428 = vsel %vm2258, %v2427, %v2423
      %v2429 = vlaneseq
      %v2430 = vshrl.u32 %v2429, 7
      %v2431 = vsub.s32 %v2260, %v2430
      %v2432 = vrot.slane %v1580, %v2431
      %v2433 = vsel %vm2265, %v2432, %v2428
      %v2434 = vlaneseq
      %v2435 = vshrl.u32 %v2434, 7
      %v2436 = vsub.s32 %v2267, %v2435
      %v2437 = vrot.slane %v1594, %v2436
      %v2438 = vsel %vm2272, %v2437, %v2433
      %v2439 = vlaneseq
      %v2440 = vshrl.u32 %v2439, 7
      %v2441 = vsub.s32 %v2274, %v2440
      %v2442 = vrot.slane %v1608, %v2441
      %v2443 = vsel %vm2279, %v2442, %v2438
      %v2444 = vlaneseq
      %v2445 = vshrl.u32 %v2444, 7
      %v2446 = vsub.s32 %v1165, %v2445
      %v2447 = vrot.slane %v1622, %v2446
      %v2448 = vlaneseq
      %v2449 = vshrl.u32 %v2448, 7
      %v2450 = vsub.s32 %v2176, %v2449
      %v2451 = vrot.slane %v1636, %v2450
      %v2452 = vsel %vm2181, %v2451, %v2447
      %v2453 = vlaneseq
      %v2454 = vshrl.u32 %v2453, 7
      %v2455 = vsub.s32 %v2183, %v2454
      %v2456 = vrot.slane %v1650, %v2455
      %v2457 = vsel %vm2188, %v2456, %v2452
      %v2458 = vlaneseq
      %v2459 = vshrl.u32 %v2458, 7
      %v2460 = vsub.s32 %v2190, %v2459
      %v2461 = vrot.slane %v1664, %v2460
      %v2462 = vsel %vm2195, %v2461, %v2457
      %v2463 = vlaneseq
      %v2464 = vshrl.u32 %v2463, 7
      %v2465 = vsub.s32 %v2197, %v2464
      %v2466 = vrot.slane %v1678, %v2465
      %v2467 = vsel %vm2202, %v2466, %v2462
      %v2468 = vlaneseq
      %v2469 = vshrl.u32 %v2468, 7
      %v2470 = vsub.s32 %v2204, %v2469
      %v2471 = vrot.slane %v1692, %v2470
      %v2472 = vsel %vm2209, %v2471, %v2467
      %v2473 = vlaneseq
      %v2474 = vshrl.u32 %v2473, 7
      %v2475 = vsub.s32 %v2211, %v2474
      %v2476 = vrot.slane %v1706, %v2475
      %v2477 = vsel %vm2216, %v2476, %v2472
      %v2478 = vlaneseq
      %v2479 = vshrl.u32 %v2478, 7
      %v2480 = vsub.s32 %v2218, %v2479
      %v2481 = vrot.slane %v1720, %v2480
      %v2482 = vsel %vm2223, %v2481, %v2477
      %v2483 = vlaneseq
      %v2484 = vshrl.u32 %v2483, 7
      %v2485 = vsub.s32 %v2225, %v2484
      %v2486 = vrot.slane %v1734, %v2485
      %v2487 = vsel %vm2230, %v2486, %v2482
      %v2488 = vlaneseq
      %v2489 = vshrl.u32 %v2488, 7
      %v2490 = vsub.s32 %v2232, %v2489
      %v2491 = vrot.slane %v1748, %v2490
      %v2492 = vsel %vm2237, %v2491, %v2487
      %v2493 = vlaneseq
      %v2494 = vshrl.u32 %v2493, 7
      %v2495 = vsub.s32 %v2239, %v2494
      %v2496 = vrot.slane %v1762, %v2495
      %v2497 = vsel %vm2244, %v2496, %v2492
      %v2498 = vlaneseq
      %v2499 = vshrl.u32 %v2498, 7
      %v2500 = vsub.s32 %v2246, %v2499
      %v2501 = vrot.slane %v1776, %v2500
      %v2502 = vsel %vm2251, %v2501, %v2497
      %v2503 = vlaneseq
      %v2504 = vshrl.u32 %v2503, 7
      %v2505 = vsub.s32 %v2253, %v2504
      %v2506 = vrot.slane %v1790, %v2505
      %v2507 = vsel %vm2258, %v2506, %v2502
      %v2508 = vlaneseq
      %v2509 = vshrl.u32 %v2508, 7
      %v2510 = vsub.s32 %v2260, %v2509
      %v2511 = vrot.slane %v1804, %v2510
      %v2512 = vsel %vm2265, %v2511, %v2507
      %v2513 = vlaneseq
      %v2514 = vshrl.u32 %v2513, 7
      %v2515 = vsub.s32 %v2267, %v2514
      %v2516 = vrot.slane %v1818, %v2515
      %v2517 = vsel %vm2272, %v2516, %v2512
      %v2518 = vlaneseq
      %v2519 = vshrl.u32 %v2518, 7
      %v2520 = vsub.s32 %v2274, %v2519
      %v2521 = vrot.slane %v1832, %v2520
      %v2522 = vsel %vm2279, %v2521, %v2517
      %s2523 = scalar_lea.vmem %s11, %s1186
      %2524 = vst [vmem:[%s2523] sm:$0x1] %v2443
      %2525 = vst [vmem:[%s2523 + $0x8] sm:$0x1] %v2522
    $region70: #{tpu_custom_call.1} parent=1 // loop_footer
      %s1188 = sadd.s32 %s1186, 1
    $region71: #{tpu_custom_call.1} parent=1 // loop_footer_branch
      %1185 = sbr.rel target = $region67
    $region72: #{tpu_custom_call.1} parent=1 // loop_exit
      _
    %v2526 = vld [vmem:[#allocation3] sm:$0x3]
    %v2527 = vld [vmem:[%s10 + $0x8] sm:$0x1]
    %v2528 = vlaneseq
    %v2529 = vshrl.u32 %v2528, 7
    %v2530 = vsub.s32 0, %v2529
    %v2531 = vrot.slane %v2527, %v2530
    %v2532 = vadd.f32 %v2526, %v2531
    %2533 = vst [vmem:[#allocation14] sm:$0x3] %v2532
    // Predicated region
    $region73: #{tpu_custom_call.1} parent=1 // pred_check
      _
    $region74: #{tpu_custom_call.1} parent=1 // pred_check_branch
      %2535 = sbr.rel (0) target = $region76
    $region75: #{tpu_custom_call.1} parent=1 // pred_region
      _
    $region76: #{tpu_custom_call.1} parent=1 // pred_fallthru
      _
    // Predicated region
    $region77: #{tpu_custom_call.1} parent=1 // pred_check
      _
    $region78: #{tpu_custom_call.1} parent=1 // pred_check_branch
      %2537 = sbr.rel (0) target = $region80
    $region79: #{tpu_custom_call.1} parent=1 // pred_region
      %s2539 = ssub.s32 32, 32
      %2540 = vsyncadd [#allocation7], %s2539
      %s2542 = sshll.u32 [#allocation14], 4
      %s2543 = int_to_ptr.vmem [resolvable:$true] %s2542
      %2545 = dma.vmem_to_hbm [thread:$0]  %s2543, 32, %s12, [#allocation7]
    $region80: #{tpu_custom_call.1} parent=1 // pred_fallthru
      _
    // Predicated region
    $region81: #{tpu_custom_call.1} parent=1 // pred_check
      _
    $region82: #{tpu_custom_call.1} parent=1 // pred_check_branch
      %2547 = sbr.rel (0) target = $region84
    $region83: #{tpu_custom_call.1} parent=1 // pred_region
      _
    $region84: #{tpu_custom_call.1} parent=1 // pred_fallthru
      _
    // Predicated region
    $region85: #{tpu_custom_call.1} parent=1 // pred_check
      _
    $region86: #{tpu_custom_call.1} parent=1 // pred_check_branch
      %2549 = sbr.rel (0) target = $region88
    $region87: #{tpu_custom_call.1} parent=1 // pred_region
      %2550 = dma.done [#allocation7], 32
    $region88: #{tpu_custom_call.1} parent=1 // pred_fallthru
      _
    %2551 = vsyncpa [#allocation6], 1
    %2552 = vsyncpa [#allocation9], 1
    %2553 = vsyncpa [#allocation12], 1
    %2554 = vsyncpa [#allocation7], 1

</llo_original>
